<compile_context>
chip_gen: v7x
topology: tpu7x:2x2x1
jax: 0.10.0
libtpu: 0.0.40
codegen_flags: <defaults>
</compile_context>

<pallas_src>
import collections
import functools

import jax
import jax.numpy as jnp
import numpy as np
from jax.experimental import pallas as pl
from jax.experimental.pallas import tpu as pltpu

LANE = 128
VMEM_SPEC = pl.BlockSpec(memory_space=pltpu.MemorySpace.VMEM)

# Flip to jnp.bfloat16 on v6e/v7x at production sizes (f32 accumulation kept
# via preferred_element_type).  Left at f32 so the tight 1e-4 check against
# the f32 reference is meaningful.
MXU_DTYPE = jnp.float32


def _round_up(n, m):
    return (n + m - 1) // m * m


def _build_tile(sizes, reps, n_rows, n_cols):
    """Block-diagonal 0/1 'tile' matrix: for block k (input width sizes[k],
    repeated reps[k] times), x @ T copies input element j into output columns
    col_off + i*sizes[k] + j for i in range(reps[k]).  Padding rows/cols 0."""
    t = np.zeros((n_rows, n_cols), np.float32)
    r = c = 0
    for size, rep in zip(sizes, reps):
        for i in range(rep):
            for j in range(size):
                t[r + j, c + i * size + j] = 1.0
        r += size
        c += rep * size
    return jnp.asarray(t)


def _build_seg(sizes, groups, n_rows, n_cols):
    """Block-diagonal 0/1 'segment-sum' matrix: for block k, x @ S sums each
    contiguous length-sizes[k] group of lanes into one output lane (on the
    MXU instead of an XLU lane reduce).  Padding rows/cols are 0."""
    s = np.zeros((n_rows, n_cols), np.float32)
    r = c = 0
    for size, grp in zip(sizes, groups):
        for g in range(grp):
            for j in range(size):
                s[r + g * size + j, c + g] = 1.0
        r += grp * size
        c += grp
    return jnp.asarray(s)


# ------------------------------ fused kernel ------------------------------- #

def _fused_kernel(layout, x_ref, v_ref, w_ref, b_ref, s1_ref, s2_ref, o_ref):
    """Entire DoubleHeadedHyPoGen forward, grid-less, everything VMEM/vreg
    resident.  `layout` is static Python (offsets into the packed slabs)."""
    w_off, b_off = layout['w_off'], layout['b_off']
    pA, pB, pC, pD = layout['pA'], layout['pB'], layout['pC'], layout['pD']

    def W(name):                       # static 128-aligned lane slice -> view
        o, n = w_off[name]
        return w_ref[:, o:o + n]

    def Bv(name):
        o, n = b_off[name]
        return b_ref[:, o:o + n]

    def mm(x, w):
        if MXU_DTYPE != jnp.float32:   # weights are pre-cast host-side
            x = x.astype(MXU_DTYPE)
        return jnp.dot(x, w, preferred_element_type=jnp.float32)

    def lin(x, name):
        return mm(x, W(name)) + Bv(name)

    def resblock(x, na, nb):
        h = jnp.maximum(x, 0.0)
        h = lin(h, na)
        h = jnp.maximum(h, 0.0)
        h = lin(h, nb)
        return x + h

    # ---- Meta_Embedding: 3 Linears + 6 ResBlocks on 128-lane slabs ---------
    z = lin(x_ref[...], 'l0')
    z = resblock(z, 'rb1a', 'rb1b')
    z = resblock(z, 'rb2a', 'rb2b')
    z = lin(z, 'l1')
    z = resblock(z, 'rb3a', 'rb3b')
    z = resblock(z, 'rb4a', 'rb4b')
    z = lin(z, 'l2')
    z = resblock(z, 'rb5a', 'rb5b')
    z = resblock(z, 'rb6a', 'rb6b')                  # (B, 128), z in [0:z_dim]

    # ---- all 8 per-sample weight/bias projections: ONE wide MXU matmul -----
    head = lin(z, 'head')                            # (B, pA+pB+pC+pD)
    w1f = head[:, 0:pA]                              # [W1_1 flat | W1_2 flat]
    b1 = head[:, pA:pA + pB]                         # [b1_1 | b1_2]
    w2f = head[:, pA + pB:pA + pB + pC]              # [W2_1 flat | W2_2 flat]
    b2 = head[:, pA + pB + pC:pA + pB + pC + pD]     # [b2_1 | b2_2]

    # ---- both per-sample target nets in one block-diagonal pass ------------
    # y_k = W2_k @ relu(W1_k @ v_k + b1_k) + b2_k  without reshaping to
    # (B, out, in) and without an XLU lane reduce: tile v/h along lanes via a
    # 0/1 matmul, multiply elementwise (VPU), segment-sum via a 0/1 matmul.
    vt = mm(v_ref[...], W('t1'))                     # (B, pA)  v tiled per row
    h = jnp.maximum(mm(w1f * vt, s1_ref[...]) + b1, 0.0)   # (B, pB) = [h1|h2]
    ht = mm(h, W('t2'))                              # (B, pC)  h tiled per row
    y = mm(w2f * ht, s2_ref[...]) + b2               # (B, pD) = [y1|y2]

    # ---- single full-width, lane-dense, unmasked output store --------------
    o_ref[...] = jnp.concatenate([z, y], axis=1)     # (B, 128 + pD)


# ------------------------- parameter construction -------------------------- #

def init_params(key, meta_dim, z_dim, in_dims, out_dims, dyn_dim):
    q, h = z_dim // 4, z_dim // 2
    keys = iter(jax.random.split(key, 64))

    def lin(din, dout):
        s = 1.0 / float(din) ** 0.5
        w = jax.random.uniform(next(keys), (din, dout), jnp.float32, -s, s)
        b = jax.random.uniform(next(keys), (1, dout), jnp.float32, -s, s)
        return (w, b)

    def resblock(dim):
        return lin(dim, dim) + lin(dim, dim)   # (w1, b1, w2, b2)

    def head(latent, din, dout):
        # Head.W1: Linear(latent, din*dout) ; Head.b1: Linear(latent, dout)
        Ww, Wb = lin(latent, din * dout)
        bw, bb = lin(latent, dout)
        return dict(Ww=Ww, Wb=Wb, bw=bw, bb=bb)

    return dict(
        l0=lin(meta_dim, q),
        rb1=resblock(q), rb2=resblock(q),
        l1=lin(q, h),
        rb3=resblock(h), rb4=resblock(h),
        l2=lin(h, z_dim),
        rb5=resblock(z_dim), rb6=resblock(z_dim),
        layer1_1=head(z_dim, in_dims[0], dyn_dim),
        last_layer_1=head(z_dim, dyn_dim, out_dims[0]),
        layer1_2=head(z_dim, in_dims[1], dyn_dim),
        last_layer_2=head(z_dim, dyn_dim, out_dims[1]),
    )


def fuse_params(p, meta_dim, in_dims, out_dims, dyn):
    """One-time host-side packing: all weights into ONE (128, K) lane-padded
    slab, all biases into ONE (1, K) slab, block-diagonal tile / segment-sum
    matrices for the fused two-head target-net pass."""
    z_dim = p['l2'][0].shape[1]
    din1, din2 = in_dims
    dout1, dout2 = out_dims

    assert meta_dim <= LANE and z_dim <= LANE
    assert din1 + din2 <= LANE
    assert 2 * dyn <= LANE and dout1 + dout2 <= LANE

    w_blocks, b_blocks = [], []
    w_off, b_off = {}, {}
    w_cur, b_cur = 0, 0

    def add_w(name, w):
        nonlocal w_cur
        rows, cols = w.shape
        assert rows <= LANE
        pcols = _round_up(cols, LANE)
        blk = jnp.zeros((LANE, pcols), MXU_DTYPE).at[:rows, :cols].set(
            w.astype(MXU_DTYPE))
        w_blocks.append(blk)
        w_off[name] = (w_cur, pcols)
        w_cur += pcols

    def add_b(name, b):
        nonlocal b_cur
        b = b.reshape(1, -1)
        pcols = _round_up(b.shape[1], LANE)
        blk = jnp.zeros((1, pcols), jnp.float32).at[:, :b.shape[1]].set(b)
        b_blocks.append(blk)
        b_off[name] = (b_cur, pcols)
        b_cur += pcols

    def add_lin(name, wb):
        w, b = wb
        add_w(name, w)
        add_b(name, b)

    # --- Meta_Embedding (15 Linears) ---
    add_lin('l0', p['l0'])
    for rb in ('rb1', 'rb2'):
        add_lin(rb + 'a', p[rb][0:2]); add_lin(rb + 'b', p[rb][2:4])
    add_lin('l1', p['l1'])
    for rb in ('rb3', 'rb4'):
        add_lin(rb + 'a', p[rb][0:2]); add_lin(rb + 'b', p[rb][2:4])
    add_lin('l2', p['l2'])
    for rb in ('rb5', 'rb6'):
        add_lin(rb + 'a', p[rb][0:2]); add_lin(rb + 'b', p[rb][2:4])

    # --- head projections: 4 role-sections, nets lane-adjacent within each ---
    h11, hl1 = p['layer1_1'], p['last_layer_1']
    h12, hl2 = p['layer1_2'], p['last_layer_2']
    secA_w = jnp.concatenate([h11['Ww'], h12['Ww']], axis=1)   # flat W1s
    secA_b = jnp.concatenate([h11['Wb'], h12['Wb']], axis=1)
    secB_w = jnp.concatenate([h11['bw'], h12['bw']], axis=1)   # b1s
    secB_b = jnp.concatenate([h11['bb'], h12['bb']], axis=1)
    secC_w = jnp.concatenate([hl1['Ww'], hl2['Ww']], axis=1)   # flat W2s
    secC_b = jnp.concatenate([hl1['Wb'], hl2['Wb']], axis=1)
    secD_w = jnp.concatenate([hl1['bw'], hl2['bw']], axis=1)   # b2s
    secD_b = jnp.concatenate([hl1['bb'], hl2['bb']], axis=1)

    pA = _round_up(secA_w.shape[1], LANE)
    pB = _round_up(secB_w.shape[1], LANE)
    pC = _round_up(secC_w.shape[1], LANE)
    pD = _round_up(secD_w.shape[1], LANE)
    assert pB == LANE and pD == LANE   # h_cat / y_cat live in one 128-lane slab

    def pad_cols(a, pc):
        return jnp.pad(a, ((0, 0), (0, pc - a.shape[1])))

    head_w = jnp.concatenate([pad_cols(secA_w, pA), pad_cols(secB_w, pB),
                              pad_cols(secC_w, pC), pad_cols(secD_w, pD)], axis=1)
    head_b = jnp.concatenate([pad_cols(secA_b, pA), pad_cols(secB_b, pB),
                              pad_cols(secC_b, pC), pad_cols(secD_b, pD)], axis=1)
    add_w('head', head_w)   # one contiguous 128-multiple-wide block
    add_b('head', head_b)

    # --- block-diagonal tile / segment-sum matrices (both heads at once) ---
    add_w('t1', _build_tile([din1, din2], [dyn, dyn], LANE, pA))
    add_w('t2', _build_tile([dyn, dyn], [dout1, dout2], pB, pC))
    s1 = _build_seg([din1, din2], [dyn, dyn], pA, pB).astype(MXU_DTYPE)
    s2 = _build_seg([dyn, dyn], [dout1, dout2], pC, pD).astype(MXU_DTYPE)

    w_slab = jnp.concatenate(w_blocks, axis=1)     # (128, w_cur)
    b_slab = jnp.concatenate(b_blocks, axis=1)     # (1, b_cur)

    layout = dict(
        w_off=w_off, b_off=b_off, pA=pA, pB=pB, pC=pC, pD=pD,
        meta_dim=meta_dim, z_dim=z_dim,
        din1=din1, din2=din2, dout1=dout1, dout2=dout2, dyn=dyn,
        out_width=LANE + pD,
    )
    return dict(w_slab=w_slab, b_slab=b_slab, s1=s1, s2=s2, layout=layout)


# ------------------------------ forward pass ------------------------------- #

def double_headed_hypernet_forward(fused, meta_v, base_v_1, base_v_2):
    lay = fused['layout']
    B = meta_v.shape[0]

    # Lane-dense padded inputs: meta_v -> (B,128), [v1 | v2] -> (B,128).
    x_in = jnp.zeros((B, LANE), jnp.float32).at[:, :lay['meta_dim']].set(meta_v)
    v_cat = (jnp.zeros((B, LANE), jnp.float32)
             .at[:, :lay['din1']].set(base_v_1)
             .at[:, lay['din1']:lay['din1'] + lay['din2']].set(base_v_2))

    w_slab, b_slab = fused['w_slab'], fused['b_slab']
    s1, s2 = fused['s1'], fused['s2']

    flops = 2 * B * (LANE * w_slab.shape[1]
                     + s1.shape[0] * s1.shape[1]
                     + s2.shape[0] * s2.shape[1])
    bytes_accessed = 4 * (x_in.size + v_cat.size + b_slab.size + s1.size
                          + s2.size + B * lay['out_width']) \
        + w_slab.size * w_slab.dtype.itemsize

    packed = pl.pallas_call(
        functools.partial(_fused_kernel, lay),
        out_shape=jax.ShapeDtypeStruct((B, lay['out_width']), jnp.float32),
        in_specs=[VMEM_SPEC] * 6,
        out_specs=VMEM_SPEC,
        cost_estimate=pl.CostEstimate(flops=flops, transcendentals=0,
                                      bytes_accessed=bytes_accessed),
    )(x_in, v_cat, w_slab, b_slab, s1, s2)

    z = packed[:, :lay['z_dim']]
    out_1 = packed[:, LANE:LANE + lay['dout1']]
    out_2 = packed[:, LANE + lay['dout1']:LANE + lay['dout1'] + lay['dout2']]
    # base_output_activation = [None, None] -> identity
    return z, out_1, out_2


# --------------------------- pure-JAX reference ----------------------------- #

def ref_forward(p, meta_v, v1, v2, in_dims, out_dims, dyn):
    def lin(x, wb):
        w, b = wb
        return x @ w + b

    def rb(x, wb):
        w1, b1, w2, b2 = wb
        h = jnp.maximum(x, 0.0)
        h = h @ w1 + b1
        h = jnp.maximum(h, 0.0)
        h = h @ w2 + b2
        return x + h

    z = lin(meta_v, p['l0']); z = rb(z, p['rb1']); z = rb(z, p['rb2'])
    z = lin(z, p['l1']);      z = rb(z, p['rb3']); z = rb(z, p['rb4'])
    z = lin(z, p['l2']);      z = rb(z, p['rb5']); z = rb(z, p['rb6'])

    def net(v, h1, h2, din, dout):
        B = z.shape[0]
        w1 = (z @ h1['Ww'] + h1['Wb']).reshape(B, dyn, din)
        b1 = (z @ h1['bw'] + h1['bb']).reshape(B, dyn, 1)
        w2 = (z @ h2['Ww'] + h2['Wb']).reshape(B, dout, dyn)
        b2 = (z @ h2['bw'] + h2['bb']).reshape(B, dout, 1)
        o = jnp.maximum(jnp.matmul(w1, v[:, :, None]) + b1, 0.0)
        o = jnp.matmul(w2, o) + b2
        return o.reshape(B, -1)

    return (z,
            net(v1, p['layer1_1'], p['last_layer_1'], in_dims[0], out_dims[0]),
            net(v2, p['layer1_2'], p['last_layer_2'], in_dims[1], out_dims[1]))


# ---------------------------------- main ------------------------------------ #

if __name__ == "__main__":
    META, Z, DYN, B = 8, 32, 16, 2
    IN_DIMS = [6, 10]
    OUT_DIMS = [4, 3]

    key = jax.random.PRNGKey(0)
    kp, k1, k2, k3 = jax.random.split(key, 4)
    params = init_params(kp, META, Z, IN_DIMS, OUT_DIMS, DYN)
    fused = fuse_params(params, META, IN_DIMS, OUT_DIMS, DYN)

    meta_v = jax.random.normal(k1, (B, META), jnp.float32)
    base_v_1 = jax.random.normal(k2, (B, IN_DIMS[0]), jnp.float32)
    base_v_2 = jax.random.normal(k3, (B, IN_DIMS[1]), jnp.float32)

    z, out1, out2 = double_headed_hypernet_forward(fused, meta_v, base_v_1, base_v_2)
    jax.block_until_ready((z, out1, out2))

    # Reference at true-f32 matmul precision so the tolerance can stay tight.
    with jax.default_matmul_precision("highest"):
        z_ref, o1_ref, o2_ref = ref_forward(
            params, meta_v, base_v_1, base_v_2, IN_DIMS, OUT_DIMS, DYN)
        jax.block_until_ready((z_ref, o1_ref, o2_ref))

    assert z.shape == (B, Z)
    assert out1.shape == (B, OUT_DIMS[0])
    assert out2.shape == (B, OUT_DIMS[1])
    assert jnp.allclose(z, z_ref, atol=1e-4, rtol=1e-4)
    assert jnp.allclose(out1, o1_ref, atol=1e-4, rtol=1e-4)
    assert jnp.allclose(out2, o2_ref, atol=1e-4, rtol=1e-4)

    print("KERNEL_OK")
</pallas_src>

<mosaic_0001>
module attributes {stable_mosaic.version = 11 : i64} {
  func.func @_fused_kernel(%arg0: memref<2x128xf32, #tpu.memory_space<vmem>>, %arg1: memref<2x128xf32, #tpu.memory_space<vmem>>, %arg2: memref<128x2944xf32, #tpu.memory_space<vmem>>, %arg3: memref<1x2560xf32, #tpu.memory_space<vmem>>, %arg4: memref<256x128xf32, #tpu.memory_space<vmem>>, %arg5: memref<128x128xf32, #tpu.memory_space<vmem>>, %arg6: memref<2x256xf32, #tpu.memory_space<vmem>>) attributes {dimension_semantics = [], scalar_prefetch = 0 : i64, scratch_operands = 0 : i64, tpu.core_type = #tpu.core_type<tc>} {
    %c0 = arith.constant 0 : index
    %c0_0 = arith.constant 0 : index
    %0 = vector.load %arg0[%c0, %c0_0] : memref<2x128xf32, #tpu.memory_space<vmem>>, vector<2x128xf32>
    %c0_1 = arith.constant 0 : index
    %c0_2 = arith.constant 0 : index
    %1 = vector.load %arg2[%c0_1, %c0_2] : memref<128x2944xf32, #tpu.memory_space<vmem>>, vector<128x128xf32>
    %cst = arith.constant dense<0.000000e+00> : vector<2x128xf32>
    %2 = tpu.matmul %0, %1, %cst {dimension_numbers = #tpu.dot_dimension_numbers<[1], [0], [0], [1], [0, 0, 1, 1], [], []>} : vector<2x128xf32>, vector<128x128xf32>, vector<2x128xf32> -> vector<2x128xf32>
    %c0_3 = arith.constant 0 : index
    %c0_4 = arith.constant 0 : index
    %3 = vector.load %arg3[%c0_3, %c0_4] : memref<1x2560xf32, #tpu.memory_space<vmem>>, vector<1x128xf32>
    %4 = vector.broadcast %3 : vector<1x128xf32> to vector<2x128xf32>
    %5 = arith.addf %2, %4 : vector<2x128xf32>
    %cst_5 = arith.constant 0.000000e+00 : f32
    %6 = vector.broadcast %cst_5 : f32 to vector<2x128xf32>
    %7 = arith.maximumf %5, %6 : vector<2x128xf32>
    %c0_6 = arith.constant 0 : index
    %c128 = arith.constant 128 : index
    %8 = vector.load %arg2[%c0_6, %c128] : memref<128x2944xf32, #tpu.memory_space<vmem>>, vector<128x128xf32>
    %cst_7 = arith.constant dense<0.000000e+00> : vector<2x128xf32>
    %9 = tpu.matmul %7, %8, %cst_7 {dimension_numbers = #tpu.dot_dimension_numbers<[1], [0], [0], [1], [0, 0, 1, 1], [], []>} : vector<2x128xf32>, vector<128x128xf32>, vector<2x128xf32> -> vector<2x128xf32>
    %c0_8 = arith.constant 0 : index
    %c128_9 = arith.constant 128 : index
    %10 = vector.load %arg3[%c0_8, %c128_9] : memref<1x2560xf32, #tpu.memory_space<vmem>>, vector<1x128xf32>
    %11 = vector.broadcast %10 : vector<1x128xf32> to vector<2x128xf32>
    %12 = arith.addf %9, %11 : vector<2x128xf32>
    %cst_10 = arith.constant 0.000000e+00 : f32
    %13 = vector.broadcast %cst_10 : f32 to vector<2x128xf32>
    %14 = arith.maximumf %12, %13 : vector<2x128xf32>
    %c0_11 = arith.constant 0 : index
    %c256 = arith.constant 256 : index
    %15 = vector.load %arg2[%c0_11, %c256] : memref<128x2944xf32, #tpu.memory_space<vmem>>, vector<128x128xf32>
    %cst_12 = arith.constant dense<0.000000e+00> : vector<2x128xf32>
    %16 = tpu.matmul %14, %15, %cst_12 {dimension_numbers = #tpu.dot_dimension_numbers<[1], [0], [0], [1], [0, 0, 1, 1], [], []>} : vector<2x128xf32>, vector<128x128xf32>, vector<2x128xf32> -> vector<2x128xf32>
    %c0_13 = arith.constant 0 : index
    %c256_14 = arith.constant 256 : index
    %17 = vector.load %arg3[%c0_13, %c256_14] : memref<1x2560xf32, #tpu.memory_space<vmem>>, vector<1x128xf32>
    %18 = vector.broadcast %17 : vector<1x128xf32> to vector<2x128xf32>
    %19 = arith.addf %16, %18 : vector<2x128xf32>
    %20 = arith.addf %5, %19 : vector<2x128xf32>
    %cst_15 = arith.constant 0.000000e+00 : f32
    %21 = vector.broadcast %cst_15 : f32 to vector<2x128xf32>
    %22 = arith.maximumf %20, %21 : vector<2x128xf32>
    %c0_16 = arith.constant 0 : index
    %c384 = arith.constant 384 : index
    %23 = vector.load %arg2[%c0_16, %c384] : memref<128x2944xf32, #tpu.memory_space<vmem>>, vector<128x128xf32>
    %cst_17 = arith.constant dense<0.000000e+00> : vector<2x128xf32>
    %24 = tpu.matmul %22, %23, %cst_17 {dimension_numbers = #tpu.dot_dimension_numbers<[1], [0], [0], [1], [0, 0, 1, 1], [], []>} : vector<2x128xf32>, vector<128x128xf32>, vector<2x128xf32> -> vector<2x128xf32>
    %c0_18 = arith.constant 0 : index
    %c384_19 = arith.constant 384 : index
    %25 = vector.load %arg3[%c0_18, %c384_19] : memref<1x2560xf32, #tpu.memory_space<vmem>>, vector<1x128xf32>
    %26 = vector.broadcast %25 : vector<1x128xf32> to vector<2x128xf32>
    %27 = arith.addf %24, %26 : vector<2x128xf32>
    %cst_20 = arith.constant 0.000000e+00 : f32
    %28 = vector.broadcast %cst_20 : f32 to vector<2x128xf32>
    %29 = arith.maximumf %27, %28 : vector<2x128xf32>
    %c0_21 = arith.constant 0 : index
    %c512 = arith.constant 512 : index
    %30 = vector.load %arg2[%c0_21, %c512] : memref<128x2944xf32, #tpu.memory_space<vmem>>, vector<128x128xf32>
    %cst_22 = arith.constant dense<0.000000e+00> : vector<2x128xf32>
    %31 = tpu.matmul %29, %30, %cst_22 {dimension_numbers = #tpu.dot_dimension_numbers<[1], [0], [0], [1], [0, 0, 1, 1], [], []>} : vector<2x128xf32>, vector<128x128xf32>, vector<2x128xf32> -> vector<2x128xf32>
    %c0_23 = arith.constant 0 : index
    %c512_24 = arith.constant 512 : index
    %32 = vector.load %arg3[%c0_23, %c512_24] : memref<1x2560xf32, #tpu.memory_space<vmem>>, vector<1x128xf32>
    %33 = vector.broadcast %32 : vector<1x128xf32> to vector<2x128xf32>
    %34 = arith.addf %31, %33 : vector<2x128xf32>
    %35 = arith.addf %20, %34 : vector<2x128xf32>
    %c0_25 = arith.constant 0 : index
    %c640 = arith.constant 640 : index
    %36 = vector.load %arg2[%c0_25, %c640] : memref<128x2944xf32, #tpu.memory_space<vmem>>, vector<128x128xf32>
    %cst_26 = arith.constant dense<0.000000e+00> : vector<2x128xf32>
    %37 = tpu.matmul %35, %36, %cst_26 {dimension_numbers = #tpu.dot_dimension_numbers<[1], [0], [0], [1], [0, 0, 1, 1], [], []>} : vector<2x128xf32>, vector<128x128xf32>, vector<2x128xf32> -> vector<2x128xf32>
    %c0_27 = arith.constant 0 : index
    %c640_28 = arith.constant 640 : index
    %38 = vector.load %arg3[%c0_27, %c640_28] : memref<1x2560xf32, #tpu.memory_space<vmem>>, vector<1x128xf32>
    %39 = vector.broadcast %38 : vector<1x128xf32> to vector<2x128xf32>
    %40 = arith.addf %37, %39 : vector<2x128xf32>
    %cst_29 = arith.constant 0.000000e+00 : f32
    %41 = vector.broadcast %cst_29 : f32 to vector<2x128xf32>
    %42 = arith.maximumf %40, %41 : vector<2x128xf32>
    %c0_30 = arith.constant 0 : index
    %c768 = arith.constant 768 : index
    %43 = vector.load %arg2[%c0_30, %c768] : memref<128x2944xf32, #tpu.memory_space<vmem>>, vector<128x128xf32>
    %cst_31 = arith.constant dense<0.000000e+00> : vector<2x128xf32>
    %44 = tpu.matmul %42, %43, %cst_31 {dimension_numbers = #tpu.dot_dimension_numbers<[1], [0], [0], [1], [0, 0, 1, 1], [], []>} : vector<2x128xf32>, vector<128x128xf32>, vector<2x128xf32> -> vector<2x128xf32>
    %c0_32 = arith.constant 0 : index
    %c768_33 = arith.constant 768 : index
    %45 = vector.load %arg3[%c0_32, %c768_33] : memref<1x2560xf32, #tpu.memory_space<vmem>>, vector<1x128xf32>
    %46 = vector.broadcast %45 : vector<1x128xf32> to vector<2x128xf32>
    %47 = arith.addf %44, %46 : vector<2x128xf32>
    %cst_34 = arith.constant 0.000000e+00 : f32
    %48 = vector.broadcast %cst_34 : f32 to vector<2x128xf32>
    %49 = arith.maximumf %47, %48 : vector<2x128xf32>
    %c0_35 = arith.constant 0 : index
    %c896 = arith.constant 896 : index
    %50 = vector.load %arg2[%c0_35, %c896] : memref<128x2944xf32, #tpu.memory_space<vmem>>, vector<128x128xf32>
    %cst_36 = arith.constant dense<0.000000e+00> : vector<2x128xf32>
    %51 = tpu.matmul %49, %50, %cst_36 {dimension_numbers = #tpu.dot_dimension_numbers<[1], [0], [0], [1], [0, 0, 1, 1], [], []>} : vector<2x128xf32>, vector<128x128xf32>, vector<2x128xf32> -> vector<2x128xf32>
    %c0_37 = arith.constant 0 : index
    %c896_38 = arith.constant 896 : index
    %52 = vector.load %arg3[%c0_37, %c896_38] : memref<1x2560xf32, #tpu.memory_space<vmem>>, vector<1x128xf32>
    %53 = vector.broadcast %52 : vector<1x128xf32> to vector<2x128xf32>
    %54 = arith.addf %51, %53 : vector<2x128xf32>
    %55 = arith.addf %40, %54 : vector<2x128xf32>
    %cst_39 = arith.constant 0.000000e+00 : f32
    %56 = vector.broadcast %cst_39 : f32 to vector<2x128xf32>
    %57 = arith.maximumf %55, %56 : vector<2x128xf32>
    %c0_40 = arith.constant 0 : index
    %c1024 = arith.constant 1024 : index
    %58 = vector.load %arg2[%c0_40, %c1024] : memref<128x2944xf32, #tpu.memory_space<vmem>>, vector<128x128xf32>
    %cst_41 = arith.constant dense<0.000000e+00> : vector<2x128xf32>
    %59 = tpu.matmul %57, %58, %cst_41 {dimension_numbers = #tpu.dot_dimension_numbers<[1], [0], [0], [1], [0, 0, 1, 1], [], []>} : vector<2x128xf32>, vector<128x128xf32>, vector<2x128xf32> -> vector<2x128xf32>
    %c0_42 = arith.constant 0 : index
    %c1024_43 = arith.constant 1024 : index
    %60 = vector.load %arg3[%c0_42, %c1024_43] : memref<1x2560xf32, #tpu.memory_space<vmem>>, vector<1x128xf32>
    %61 = vector.broadcast %60 : vector<1x128xf32> to vector<2x128xf32>
    %62 = arith.addf %59, %61 : vector<2x128xf32>
    %cst_44 = arith.constant 0.000000e+00 : f32
    %63 = vector.broadcast %cst_44 : f32 to vector<2x128xf32>
    %64 = arith.maximumf %62, %63 : vector<2x128xf32>
    %c0_45 = arith.constant 0 : index
    %c1152 = arith.constant 1152 : index
    %65 = vector.load %arg2[%c0_45, %c1152] : memref<128x2944xf32, #tpu.memory_space<vmem>>, vector<128x128xf32>
    %cst_46 = arith.constant dense<0.000000e+00> : vector<2x128xf32>
    %66 = tpu.matmul %64, %65, %cst_46 {dimension_numbers = #tpu.dot_dimension_numbers<[1], [0], [0], [1], [0, 0, 1, 1], [], []>} : vector<2x128xf32>, vector<128x128xf32>, vector<2x128xf32> -> vector<2x128xf32>
    %c0_47 = arith.constant 0 : index
    %c1152_48 = arith.constant 1152 : index
    %67 = vector.load %arg3[%c0_47, %c1152_48] : memref<1x2560xf32, #tpu.memory_space<vmem>>, vector<1x128xf32>
    %68 = vector.broadcast %67 : vector<1x128xf32> to vector<2x128xf32>
    %69 = arith.addf %66, %68 : vector<2x128xf32>
    %70 = arith.addf %55, %69 : vector<2x128xf32>
    %c0_49 = arith.constant 0 : index
    %c1280 = arith.constant 1280 : index
    %71 = vector.load %arg2[%c0_49, %c1280] : memref<128x2944xf32, #tpu.memory_space<vmem>>, vector<128x128xf32>
    %cst_50 = arith.constant dense<0.000000e+00> : vector<2x128xf32>
    %72 = tpu.matmul %70, %71, %cst_50 {dimension_numbers = #tpu.dot_dimension_numbers<[1], [0], [0], [1], [0, 0, 1, 1], [], []>} : vector<2x128xf32>, vector<128x128xf32>, vector<2x128xf32> -> vector<2x128xf32>
    %c0_51 = arith.constant 0 : index
    %c1280_52 = arith.constant 1280 : index
    %73 = vector.load %arg3[%c0_51, %c1280_52] : memref<1x2560xf32, #tpu.memory_space<vmem>>, vector<1x128xf32>
    %74 = vector.broadcast %73 : vector<1x128xf32> to vector<2x128xf32>
    %75 = arith.addf %72, %74 : vector<2x128xf32>
    %cst_53 = arith.constant 0.000000e+00 : f32
    %76 = vector.broadcast %cst_53 : f32 to vector<2x128xf32>
    %77 = arith.maximumf %75, %76 : vector<2x128xf32>
    %c0_54 = arith.constant 0 : index
    %c1408 = arith.constant 1408 : index
    %78 = vector.load %arg2[%c0_54, %c1408] : memref<128x2944xf32, #tpu.memory_space<vmem>>, vector<128x128xf32>
    %cst_55 = arith.constant dense<0.000000e+00> : vector<2x128xf32>
    %79 = tpu.matmul %77, %78, %cst_55 {dimension_numbers = #tpu.dot_dimension_numbers<[1], [0], [0], [1], [0, 0, 1, 1], [], []>} : vector<2x128xf32>, vector<128x128xf32>, vector<2x128xf32> -> vector<2x128xf32>
    %c0_56 = arith.constant 0 : index
    %c1408_57 = arith.constant 1408 : index
    %80 = vector.load %arg3[%c0_56, %c1408_57] : memref<1x2560xf32, #tpu.memory_space<vmem>>, vector<1x128xf32>
    %81 = vector.broadcast %80 : vector<1x128xf32> to vector<2x128xf32>
    %82 = arith.addf %79, %81 : vector<2x128xf32>
    %cst_58 = arith.constant 0.000000e+00 : f32
    %83 = vector.broadcast %cst_58 : f32 to vector<2x128xf32>
    %84 = arith.maximumf %82, %83 : vector<2x128xf32>
    %c0_59 = arith.constant 0 : index
    %c1536 = arith.constant 1536 : index
    %85 = vector.load %arg2[%c0_59, %c1536] : memref<128x2944xf32, #tpu.memory_space<vmem>>, vector<128x128xf32>
    %cst_60 = arith.constant dense<0.000000e+00> : vector<2x128xf32>
    %86 = tpu.matmul %84, %85, %cst_60 {dimension_numbers = #tpu.dot_dimension_numbers<[1], [0], [0], [1], [0, 0, 1, 1], [], []>} : vector<2x128xf32>, vector<128x128xf32>, vector<2x128xf32> -> vector<2x128xf32>
    %c0_61 = arith.constant 0 : index
    %c1536_62 = arith.constant 1536 : index
    %87 = vector.load %arg3[%c0_61, %c1536_62] : memref<1x2560xf32, #tpu.memory_space<vmem>>, vector<1x128xf32>
    %88 = vector.broadcast %87 : vector<1x128xf32> to vector<2x128xf32>
    %89 = arith.addf %86, %88 : vector<2x128xf32>
    %90 = arith.addf %75, %89 : vector<2x128xf32>
    %cst_63 = arith.constant 0.000000e+00 : f32
    %91 = vector.broadcast %cst_63 : f32 to vector<2x128xf32>
    %92 = arith.maximumf %90, %91 : vector<2x128xf32>
    %c0_64 = arith.constant 0 : index
    %c1664 = arith.constant 1664 : index
    %93 = vector.load %arg2[%c0_64, %c1664] : memref<128x2944xf32, #tpu.memory_space<vmem>>, vector<128x128xf32>
    %cst_65 = arith.constant dense<0.000000e+00> : vector<2x128xf32>
    %94 = tpu.matmul %92, %93, %cst_65 {dimension_numbers = #tpu.dot_dimension_numbers<[1], [0], [0], [1], [0, 0, 1, 1], [], []>} : vector<2x128xf32>, vector<128x128xf32>, vector<2x128xf32> -> vector<2x128xf32>
    %c0_66 = arith.constant 0 : index
    %c1664_67 = arith.constant 1664 : index
    %95 = vector.load %arg3[%c0_66, %c1664_67] : memref<1x2560xf32, #tpu.memory_space<vmem>>, vector<1x128xf32>
    %96 = vector.broadcast %95 : vector<1x128xf32> to vector<2x128xf32>
    %97 = arith.addf %94, %96 : vector<2x128xf32>
    %cst_68 = arith.constant 0.000000e+00 : f32
    %98 = vector.broadcast %cst_68 : f32 to vector<2x128xf32>
    %99 = arith.maximumf %97, %98 : vector<2x128xf32>
    %c0_69 = arith.constant 0 : index
    %c1792 = arith.constant 1792 : index
    %100 = vector.load %arg2[%c0_69, %c1792] : memref<128x2944xf32, #tpu.memory_space<vmem>>, vector<128x128xf32>
    %cst_70 = arith.constant dense<0.000000e+00> : vector<2x128xf32>
    %101 = tpu.matmul %99, %100, %cst_70 {dimension_numbers = #tpu.dot_dimension_numbers<[1], [0], [0], [1], [0, 0, 1, 1], [], []>} : vector<2x128xf32>, vector<128x128xf32>, vector<2x128xf32> -> vector<2x128xf32>
    %c0_71 = arith.constant 0 : index
    %c1792_72 = arith.constant 1792 : index
    %102 = vector.load %arg3[%c0_71, %c1792_72] : memref<1x2560xf32, #tpu.memory_space<vmem>>, vector<1x128xf32>
    %103 = vector.broadcast %102 : vector<1x128xf32> to vector<2x128xf32>
    %104 = arith.addf %101, %103 : vector<2x128xf32>
    %105 = arith.addf %90, %104 : vector<2x128xf32>
    %c0_73 = arith.constant 0 : index
    %c1920 = arith.constant 1920 : index
    %106 = vector.load %arg2[%c0_73, %c1920] : memref<128x2944xf32, #tpu.memory_space<vmem>>, vector<128x640xf32>
    %cst_74 = arith.constant dense<0.000000e+00> : vector<2x640xf32>
    %107 = tpu.matmul %105, %106, %cst_74 {dimension_numbers = #tpu.dot_dimension_numbers<[1], [0], [0], [1], [0, 0, 1, 1], [], []>} : vector<2x128xf32>, vector<128x640xf32>, vector<2x640xf32> -> vector<2x640xf32>
    %c0_75 = arith.constant 0 : index
    %c1920_76 = arith.constant 1920 : index
    %108 = vector.load %arg3[%c0_75, %c1920_76] : memref<1x2560xf32, #tpu.memory_space<vmem>>, vector<1x640xf32>
    %109 = vector.broadcast %108 : vector<1x640xf32> to vector<2x640xf32>
    %110 = arith.addf %107, %109 : vector<2x640xf32>
    %111 = vector.extract_strided_slice %110 {offsets = [0, 0], sizes = [2, 256], strides = [1, 1]} : vector<2x640xf32> to vector<2x256xf32>
    %112 = vector.extract_strided_slice %110 {offsets = [0, 256], sizes = [2, 128], strides = [1, 1]} : vector<2x640xf32> to vector<2x128xf32>
    %113 = vector.extract_strided_slice %110 {offsets = [0, 384], sizes = [2, 128], strides = [1, 1]} : vector<2x640xf32> to vector<2x128xf32>
    %114 = vector.extract_strided_slice %110 {offsets = [0, 512], sizes = [2, 128], strides = [1, 1]} : vector<2x640xf32> to vector<2x128xf32>
    %c0_77 = arith.constant 0 : index
    %c0_78 = arith.constant 0 : index
    %115 = vector.load %arg1[%c0_77, %c0_78] : memref<2x128xf32, #tpu.memory_space<vmem>>, vector<2x128xf32>
    %c0_79 = arith.constant 0 : index
    %c2560 = arith.constant 2560 : index
    %116 = vector.load %arg2[%c0_79, %c2560] : memref<128x2944xf32, #tpu.memory_space<vmem>>, vector<128x256xf32>
    %cst_80 = arith.constant dense<0.000000e+00> : vector<2x256xf32>
    %117 = tpu.matmul %115, %116, %cst_80 {dimension_numbers = #tpu.dot_dimension_numbers<[1], [0], [0], [1], [0, 0, 1, 1], [], []>} : vector<2x128xf32>, vector<128x256xf32>, vector<2x256xf32> -> vector<2x256xf32>
    %118 = arith.mulf %111, %117 : vector<2x256xf32>
    %c0_81 = arith.constant 0 : index
    %c0_82 = arith.constant 0 : index
    %119 = vector.load %arg4[%c0_81, %c0_82] : memref<256x128xf32, #tpu.memory_space<vmem>>, vector<256x128xf32>
    %cst_83 = arith.constant dense<0.000000e+00> : vector<2x128xf32>
    %120 = tpu.matmul %118, %119, %cst_83 {dimension_numbers = #tpu.dot_dimension_numbers<[1], [0], [0], [1], [0, 0, 1, 1], [], []>} : vector<2x256xf32>, vector<256x128xf32>, vector<2x128xf32> -> vector<2x128xf32>
    %121 = arith.addf %120, %112 : vector<2x128xf32>
    %cst_84 = arith.constant 0.000000e+00 : f32
    %122 = vector.broadcast %cst_84 : f32 to vector<2x128xf32>
    %123 = arith.maximumf %121, %122 : vector<2x128xf32>
    %c0_85 = arith.constant 0 : index
    %c2816 = arith.constant 2816 : index
    %124 = vector.load %arg2[%c0_85, %c2816] : memref<128x2944xf32, #tpu.memory_space<vmem>>, vector<128x128xf32>
    %cst_86 = arith.constant dense<0.000000e+00> : vector<2x128xf32>
    %125 = tpu.matmul %123, %124, %cst_86 {dimension_numbers = #tpu.dot_dimension_numbers<[1], [0], [0], [1], [0, 0, 1, 1], [], []>} : vector<2x128xf32>, vector<128x128xf32>, vector<2x128xf32> -> vector<2x128xf32>
    %126 = arith.mulf %113, %125 : vector<2x128xf32>
    %c0_87 = arith.constant 0 : index
    %c0_88 = arith.constant 0 : index
    %127 = vector.load %arg5[%c0_87, %c0_88] : memref<128x128xf32, #tpu.memory_space<vmem>>, vector<128x128xf32>
    %cst_89 = arith.constant dense<0.000000e+00> : vector<2x128xf32>
    %128 = tpu.matmul %126, %127, %cst_89 {dimension_numbers = #tpu.dot_dimension_numbers<[1], [0], [0], [1], [0, 0, 1, 1], [], []>} : vector<2x128xf32>, vector<128x128xf32>, vector<2x128xf32> -> vector<2x128xf32>
    %129 = arith.addf %128, %114 : vector<2x128xf32>
    %130 = tpu.concatenate %105, %129 in 1 : vector<2x128xf32>, vector<2x128xf32> -> vector<2x256xf32>
    %c0_90 = arith.constant 0 : index
    %c0_91 = arith.constant 0 : index
    %131 = vector.load %arg6[%c0_90, %c0_91] : memref<2x256xf32, #tpu.memory_space<vmem>>, vector<2x256xf32>
    tpu.vector_store %arg6[%c0_90, %c0_91], %130 {strides = array<i32>} : memref<2x256xf32, #tpu.memory_space<vmem>>, vector<2x256xf32>,
    return
  }
}

</mosaic_0001>

<llo_original>
// kernel: tpu_custom_call.1
$region0: #{tpu_custom_call.1}
  #allocation0 [shape = 'u32[]', space=smem, size = 0x4, offset = 0x4, fixed_abs, tag = 'smem constant byte address 0x4 - core index']
  #allocation1 [shape = 'u32[144,128]{1,0:T(1,128)}', space=vmem, size = 0x12000, scoped, tag = 'internal scratch']
  %s0 = inlined_call_operand.hbm [shape: f32[2,128], index: 0, kind: input, shape index: {}]
  %s1 = inlined_call_operand.hbm [shape: f32[2,128], index: 1, kind: input, shape index: {}]
  %s2 = inlined_call_operand.hbm [shape: f32[128,2944], index: 2, kind: input, shape index: {}]
  %s3 = inlined_call_operand.hbm [shape: f32[1,2560], index: 3, kind: input, shape index: {}]
  %s4 = inlined_call_operand.hbm [shape: f32[256,128], index: 4, kind: input, shape index: {}]
  %s5 = inlined_call_operand.hbm [shape: f32[128,128], index: 5, kind: input, shape index: {}]
  %s6 = inlined_call_operand.hbm [shape: f32[2,256], index: 6, kind: output, shape index: {}]
  %s7 = sld [smem:[#allocation0]]
  $region58: #{tpu_custom_call.1} parent=0
    _
  %s9 = ssub.s32 1, %s7
  %s10 = scalar_select 0, %s9, %s7
  $region1: #{tpu_custom_call.1} parent=0
    #allocation2 [shape = 'u8[1024]{0}', space=vmem, size = 0x400, scoped, tag = 'input window, operand 0, single buffered']
    #allocation3 [shape = 's32[1]{0}', space=sflag, size = 0x4, scoped, tag = 'scoped memory for tpu_custom_call.1']
    #allocation4 [shape = 's32[1]{0}', space=sflag, size = 0x4, scoped, tag = 'scoped memory for tpu_custom_call.1']
    #allocation5 [shape = 'u8[1024]{0}', space=vmem, size = 0x400, scoped, tag = 'input window, operand 1, single buffered']
    #allocation6 [shape = 's32[1]{0}', space=sflag, size = 0x4, scoped, tag = 'scoped memory for tpu_custom_call.1']
    #allocation7 [shape = 'u8[1507328]{0}', space=vmem, size = 0x170000, scoped, tag = 'input window, operand 2, single buffered']
    #allocation8 [shape = 'u8[10240]{0}', space=vmem, size = 0x2800, scoped, tag = 'input window, operand 3, single buffered']
    #allocation9 [shape = 's32[1]{0}', space=sflag, size = 0x4, scoped, tag = 'scoped memory for tpu_custom_call.1']
    #allocation10 [shape = 'u8[131072]{0}', space=vmem, size = 0x20000, scoped, tag = 'input window, operand 4, single buffered']
    #allocation11 [shape = 'u8[65536]{0}', space=vmem, size = 0x10000, scoped, tag = 'input window, operand 5, single buffered']
    #allocation12 [shape = 's32[1]{0}', space=sflag, size = 0x4, scoped, tag = 'scoped memory for tpu_custom_call.1']
    #allocation13 [shape = 'u8[2048]{0}', space=vmem, size = 0x800, scoped, tag = 'output window, operand 0, single buffered']
    %11 = vsyncpa [#allocation3], 0
    %12 = vsyncpa [#allocation6], 0
    %13 = vsyncpa [#allocation9], 0
    %14 = vsyncpa [#allocation12], 0
    %15 = vsyncpa [#allocation4], 0
    // Predicated region
    $region2: #{tpu_custom_call.1} parent=1 // pred_check
      _
    $region3: #{tpu_custom_call.1} parent=1 // pred_check_branch
      %17 = sbr.rel (0) target = $region5
    $region4: #{tpu_custom_call.1} parent=1 // pred_region
      %s19 = ssub.s32 32, 32
      %20 = vsyncadd [#allocation3], %s19
      %s22 = sshll.u32 [#allocation2], 4
      %s23 = int_to_ptr.vmem [resolvable:$true] %s22
      %25 = dma.hbm_to_vmem [thread:$0]  %s0, 32, %s23, [#allocation3]
    $region5: #{tpu_custom_call.1} parent=1 // pred_fallthru
      _
    // Predicated region
    $region6: #{tpu_custom_call.1} parent=1 // pred_check
      _
    $region7: #{tpu_custom_call.1} parent=1 // pred_check_branch
      %27 = sbr.rel (0) target = $region9
    $region8: #{tpu_custom_call.1} parent=1 // pred_region
      %s29 = ssub.s32 32, 32
      %30 = vsyncadd [#allocation6], %s29
      %s32 = sshll.u32 [#allocation5], 4
      %s33 = int_to_ptr.vmem [resolvable:$true] %s32
      %35 = dma.hbm_to_vmem [thread:$0]  %s1, 32, %s33, [#allocation6]
    $region9: #{tpu_custom_call.1} parent=1 // pred_fallthru
      _
    // Predicated region
    $region10: #{tpu_custom_call.1} parent=1 // pred_check
      _
    $region11: #{tpu_custom_call.1} parent=1 // pred_check_branch
      %37 = sbr.rel (0) target = $region13
    $region12: #{tpu_custom_call.1} parent=1 // pred_region
      %s39 = ssub.s32 47104, 47104
      %40 = vsyncadd [#allocation6], %s39
      %s41 = sshll.u32 [#allocation7], 4
      %s42 = int_to_ptr.vmem [resolvable:$true] %s41
      %47 = dma.hbm_to_vmem [thread:$0]  %s2, 47104, %s42, [#allocation6], 2944, 2944, 184
    $region13: #{tpu_custom_call.1} parent=1 // pred_fallthru
      _
    // Predicated region
    $region14: #{tpu_custom_call.1} parent=1 // pred_check
      _
    $region15: #{tpu_custom_call.1} parent=1 // pred_check_branch
      %49 = sbr.rel (0) target = $region17
    $region16: #{tpu_custom_call.1} parent=1 // pred_region
      %s51 = ssub.s32 320, 320
      %52 = vsyncadd [#allocation9], %s51
      %s54 = sshll.u32 [#allocation8], 4
      %s55 = int_to_ptr.vmem [resolvable:$true] %s54
      %57 = dma.hbm_to_vmem [thread:$0]  %s3, 320, %s55, [#allocation9]
    $region17: #{tpu_custom_call.1} parent=1 // pred_fallthru
      _
    // Predicated region
    $region18: #{tpu_custom_call.1} parent=1 // pred_check
      _
    $region19: #{tpu_custom_call.1} parent=1 // pred_check_branch
      %59 = sbr.rel (0) target = $region21
    $region20: #{tpu_custom_call.1} parent=1 // pred_region
      %s61 = ssub.s32 4096, 4096
      %62 = vsyncadd [#allocation9], %s61
      %s63 = sshll.u32 [#allocation10], 4
      %s64 = int_to_ptr.vmem [resolvable:$true] %s63
      %69 = dma.hbm_to_vmem [thread:$0]  %s4, 4096, %s64, [#allocation9], 128, 128, 8
    $region21: #{tpu_custom_call.1} parent=1 // pred_fallthru
      _
    // Predicated region
    $region22: #{tpu_custom_call.1} parent=1 // pred_check
      _
    $region23: #{tpu_custom_call.1} parent=1 // pred_check_branch
      %71 = sbr.rel (0) target = $region25
    $region24: #{tpu_custom_call.1} parent=1 // pred_region
      %s73 = ssub.s32 2048, 2048
      %74 = vsyncadd [#allocation12], %s73
      %s75 = sshll.u32 [#allocation11], 4
      %s76 = int_to_ptr.vmem [resolvable:$true] %s75
      %81 = dma.hbm_to_vmem [thread:$0]  %s5, 2048, %s76, [#allocation12], 128, 128, 8
    $region25: #{tpu_custom_call.1} parent=1 // pred_fallthru
      _
    // Predicated region
    $region26: #{tpu_custom_call.1} parent=1 // pred_check
      _
    $region27: #{tpu_custom_call.1} parent=1 // pred_check_branch
      %83 = sbr.rel (0) target = $region29
    $region28: #{tpu_custom_call.1} parent=1 // pred_region
      %84 = dma.done [#allocation3], 32
    $region29: #{tpu_custom_call.1} parent=1 // pred_fallthru
      _
    // Predicated region
    $region30: #{tpu_custom_call.1} parent=1 // pred_check
      _
    $region31: #{tpu_custom_call.1} parent=1 // pred_check_branch
      %86 = sbr.rel (0) target = $region33
    $region32: #{tpu_custom_call.1} parent=1 // pred_region
      %87 = dma.done [#allocation6], 32
    $region33: #{tpu_custom_call.1} parent=1 // pred_fallthru
      _
    // Predicated region
    $region34: #{tpu_custom_call.1} parent=1 // pred_check
      _
    $region35: #{tpu_custom_call.1} parent=1 // pred_check_branch
      %89 = sbr.rel (0) target = $region37
    $region36: #{tpu_custom_call.1} parent=1 // pred_region
      %90 = dma.done [#allocation6], 47104
    $region37: #{tpu_custom_call.1} parent=1 // pred_fallthru
      _
    // Predicated region
    $region38: #{tpu_custom_call.1} parent=1 // pred_check
      _
    $region39: #{tpu_custom_call.1} parent=1 // pred_check_branch
      %92 = sbr.rel (0) target = $region41
    $region40: #{tpu_custom_call.1} parent=1 // pred_region
      %93 = dma.done [#allocation9], 320
    $region41: #{tpu_custom_call.1} parent=1 // pred_fallthru
      _
    // Predicated region
    $region42: #{tpu_custom_call.1} parent=1 // pred_check
      _
    $region43: #{tpu_custom_call.1} parent=1 // pred_check_branch
      %95 = sbr.rel (0) target = $region45
    $region44: #{tpu_custom_call.1} parent=1 // pred_region
      %96 = dma.done [#allocation9], 4096
    $region45: #{tpu_custom_call.1} parent=1 // pred_fallthru
      _
    // Predicated region
    $region46: #{tpu_custom_call.1} parent=1 // pred_check
      _
    $region47: #{tpu_custom_call.1} parent=1 // pred_check_branch
      %98 = sbr.rel (0) target = $region49
    $region48: #{tpu_custom_call.1} parent=1 // pred_region
      %99 = dma.done [#allocation12], 2048
    $region49: #{tpu_custom_call.1} parent=1 // pred_fallthru
      _
    %v100 = vld [vmem:[#allocation2] sm:$0x3]
    %v101 = vld [vmem:[#allocation7] sm:$0xff]
    %v102 = vld [vmem:[#allocation7 + $0xb8] sm:$0xff]
    %v103 = vld [vmem:[#allocation7 + $0x170] sm:$0xff]
    %v104 = vld [vmem:[#allocation7 + $0x228] sm:$0xff]
    %v105 = vld [vmem:[#allocation7 + $0x2e0] sm:$0xff]
    %v106 = vld [vmem:[#allocation7 + $0x398] sm:$0xff]
    %v107 = vld [vmem:[#allocation7 + $0x450] sm:$0xff]
    %v108 = vld [vmem:[#allocation7 + $0x508] sm:$0xff]
    %v109 = vld [vmem:[#allocation7 + $0x5c0] sm:$0xff]
    %v110 = vld [vmem:[#allocation7 + $0x678] sm:$0xff]
    %v111 = vld [vmem:[#allocation7 + $0x730] sm:$0xff]
    %v112 = vld [vmem:[#allocation7 + $0x7e8] sm:$0xff]
    %v113 = vld [vmem:[#allocation7 + $0x8a0] sm:$0xff]
    %v114 = vld [vmem:[#allocation7 + $0x958] sm:$0xff]
    %v115 = vld [vmem:[#allocation7 + $0xa10] sm:$0xff]
    %v116 = vld [vmem:[#allocation7 + $0xac8] sm:$0xff]
    %v117 = vld [vmem:[#allocation8] sm:$0x1]
    %v119 = vlaneseq
    %v120 = vshrl.u32 %v119, 7
    %v121 = vsub.s32 0, %v120
    %v122 = vrot.slane %v117, %v121
    %124 = vmatprep.subr.mxu0 0.0
    %125 = vmatpush1.msra.mxu0 %v101
    %126 = vmatprep.subr.mxu0 0.0
    %127 = vmatpush1.msra.mxu0 %v102
    %128 = vmatprep.subr.mxu0 0.0
    %129 = vmatpush1.msra.mxu0 %v103
    %130 = vmatprep.subr.mxu0 0.0
    %131 = vmatpush1.msra.mxu0 %v104
    %132 = vmatprep.subr.mxu0 0.0
    %133 = vmatpush1.msra.mxu0 %v105
    %134 = vmatprep.subr.mxu0 0.0
    %135 = vmatpush1.msra.mxu0 %v106
    %136 = vmatprep.subr.mxu0 0.0
    %137 = vmatpush1.msra.mxu0 %v107
    %138 = vmatprep.subr.mxu0 0.0
    %139 = vmatpush1.msra.mxu0 %v108
    %140 = vmatprep.subr.mxu0 0.0
    %141 = vmatpush1.msra.mxu0 %v109
    %142 = vmatprep.subr.mxu0 0.0
    %143 = vmatpush1.msra.mxu0 %v110
    %144 = vmatprep.subr.mxu0 0.0
    %145 = vmatpush1.msra.mxu0 %v111
    %146 = vmatprep.subr.mxu0 0.0
    %147 = vmatpush1.msra.mxu0 %v112
    %148 = vmatprep.subr.mxu0 0.0
    %149 = vmatpush1.msra.mxu0 %v113
    %150 = vmatprep.subr.mxu0 0.0
    %151 = vmatpush1.msra.mxu0 %v114
    %152 = vmatprep.subr.mxu0 0.0
    %153 = vmatpush1.msra.mxu0 %v115
    %154 = vmatprep.subr.mxu0 0.0
    %155 = vmatpush1.msra.mxu0 %v116
    %156 = vmatprep.subr.mxu0 0.0
    %157 = vmatpush1.msra.mxu0 0.0
    %158 = vmatprep.subr.mxu0 0.0
    %159 = vmatpush1.msra.mxu0 0.0
    %160 = vmatprep.subr.mxu0 0.0
    %161 = vmatpush1.msra.mxu0 0.0
    %162 = vmatprep.subr.mxu0 0.0
    %163 = vmatpush1.msra.mxu0 0.0
    %164 = vmatprep.subr.mxu0 0.0
    %165 = vmatpush1.msra.mxu0 0.0
    %166 = vmatprep.subr.mxu0 0.0
    %167 = vmatpush1.msra.mxu0 0.0
    %168 = vmatprep.subr.mxu0 0.0
    %169 = vmatpush1.msra.mxu0 0.0
    %170 = vmatprep.subr.mxu0 0.0
    %171 = vmatpush1.msra.mxu0 0.0
    %172 = vmatprep.subr.mxu0 0.0
    %173 = vmatpush1.msra.mxu0 0.0
    %174 = vmatprep.subr.mxu0 0.0
    %175 = vmatpush1.msra.mxu0 0.0
    %176 = vmatprep.subr.mxu0 0.0
    %177 = vmatpush1.msra.mxu0 0.0
    %178 = vmatprep.subr.mxu0 0.0
    %179 = vmatpush1.msra.mxu0 0.0
    %180 = vmatprep.subr.mxu0 0.0
    %181 = vmatpush1.msra.mxu0 0.0
    %182 = vmatprep.subr.mxu0 0.0
    %183 = vmatpush1.msra.mxu0 0.0
    %184 = vmatprep.subr.mxu0 0.0
    %185 = vmatpush1.msra.mxu0 0.0
    %186 = vmatprep.subr.mxu0 0.0
    %187 = vmatpush1.msra.mxu0 0.0
    %188 = vmatprep.mubr.f32.mxu0 0.0
    %189 = vmatmul.mubr.f32.gmra.mrb[0].mxu0 %v100
    %v190 = vpop.f32.mrb[0].mxu0
    %v191 = vadd.f32 %v122, %v190
    %v192 = vpop.f32.mrb[0].mxu0
    %193 = vdwg.mxu0
    %v194 = vmax.f32 %v191, 0.0
    %v195 = vld [vmem:[#allocation7 + $0x8] sm:$0xff]
    %v196 = vld [vmem:[#allocation7 + $0xc0] sm:$0xff]
    %v197 = vld [vmem:[#allocation7 + $0x178] sm:$0xff]
    %v198 = vld [vmem:[#allocation7 + $0x230] sm:$0xff]
    %v199 = vld [vmem:[#allocation7 + $0x2e8] sm:$0xff]
    %v200 = vld [vmem:[#allocation7 + $0x3a0] sm:$0xff]
    %v201 = vld [vmem:[#allocation7 + $0x458] sm:$0xff]
    %v202 = vld [vmem:[#allocation7 + $0x510] sm:$0xff]
    %v203 = vld [vmem:[#allocation7 + $0x5c8] sm:$0xff]
    %v204 = vld [vmem:[#allocation7 + $0x680] sm:$0xff]
    %v205 = vld [vmem:[#allocation7 + $0x738] sm:$0xff]
    %v206 = vld [vmem:[#allocation7 + $0x7f0] sm:$0xff]
    %v207 = vld [vmem:[#allocation7 + $0x8a8] sm:$0xff]
    %v208 = vld [vmem:[#allocation7 + $0x960] sm:$0xff]
    %v209 = vld [vmem:[#allocation7 + $0xa18] sm:$0xff]
    %v210 = vld [vmem:[#allocation7 + $0xad0] sm:$0xff]
    %v211 = vld [vmem:[#allocation8 + $0x1] sm:$0x1]
    %v213 = vlaneseq
    %v214 = vshrl.u32 %v213, 7
    %v215 = vsub.s32 0, %v214
    %v216 = vrot.slane %v211, %v215
    %218 = vmatprep.subr.mxu0 0.0
    %219 = vmatpush1.msra.mxu0 %v195
    %220 = vmatprep.subr.mxu0 0.0
    %221 = vmatpush1.msra.mxu0 %v196
    %222 = vmatprep.subr.mxu0 0.0
    %223 = vmatpush1.msra.mxu0 %v197
    %224 = vmatprep.subr.mxu0 0.0
    %225 = vmatpush1.msra.mxu0 %v198
    %226 = vmatprep.subr.mxu0 0.0
    %227 = vmatpush1.msra.mxu0 %v199
    %228 = vmatprep.subr.mxu0 0.0
    %229 = vmatpush1.msra.mxu0 %v200
    %230 = vmatprep.subr.mxu0 0.0
    %231 = vmatpush1.msra.mxu0 %v201
    %232 = vmatprep.subr.mxu0 0.0
    %233 = vmatpush1.msra.mxu0 %v202
    %234 = vmatprep.subr.mxu0 0.0
    %235 = vmatpush1.msra.mxu0 %v203
    %236 = vmatprep.subr.mxu0 0.0
    %237 = vmatpush1.msra.mxu0 %v204
    %238 = vmatprep.subr.mxu0 0.0
    %239 = vmatpush1.msra.mxu0 %v205
    %240 = vmatprep.subr.mxu0 0.0
    %241 = vmatpush1.msra.mxu0 %v206
    %242 = vmatprep.subr.mxu0 0.0
    %243 = vmatpush1.msra.mxu0 %v207
    %244 = vmatprep.subr.mxu0 0.0
    %245 = vmatpush1.msra.mxu0 %v208
    %246 = vmatprep.subr.mxu0 0.0
    %247 = vmatpush1.msra.mxu0 %v209
    %248 = vmatprep.subr.mxu0 0.0
    %249 = vmatpush1.msra.mxu0 %v210
    %250 = vmatprep.subr.mxu0 0.0
    %251 = vmatpush1.msra.mxu0 0.0
    %252 = vmatprep.subr.mxu0 0.0
    %253 = vmatpush1.msra.mxu0 0.0
    %254 = vmatprep.subr.mxu0 0.0
    %255 = vmatpush1.msra.mxu0 0.0
    %256 = vmatprep.subr.mxu0 0.0
    %257 = vmatpush1.msra.mxu0 0.0
    %258 = vmatprep.subr.mxu0 0.0
    %259 = vmatpush1.msra.mxu0 0.0
    %260 = vmatprep.subr.mxu0 0.0
    %261 = vmatpush1.msra.mxu0 0.0
    %262 = vmatprep.subr.mxu0 0.0
    %263 = vmatpush1.msra.mxu0 0.0
    %264 = vmatprep.subr.mxu0 0.0
    %265 = vmatpush1.msra.mxu0 0.0
    %266 = vmatprep.subr.mxu0 0.0
    %267 = vmatpush1.msra.mxu0 0.0
    %268 = vmatprep.subr.mxu0 0.0
    %269 = vmatpush1.msra.mxu0 0.0
    %270 = vmatprep.subr.mxu0 0.0
    %271 = vmatpush1.msra.mxu0 0.0
    %272 = vmatprep.subr.mxu0 0.0
    %273 = vmatpush1.msra.mxu0 0.0
    %274 = vmatprep.subr.mxu0 0.0
    %275 = vmatpush1.msra.mxu0 0.0
    %276 = vmatprep.subr.mxu0 0.0
    %277 = vmatpush1.msra.mxu0 0.0
    %278 = vmatprep.subr.mxu0 0.0
    %279 = vmatpush1.msra.mxu0 0.0
    %280 = vmatprep.subr.mxu0 0.0
    %281 = vmatpush1.msra.mxu0 0.0
    %282 = vmatprep.mubr.f32.mxu0 0.0
    %283 = vmatmul.mubr.f32.gmra.mrb[0].mxu0 %v194
    %v284 = vpop.f32.mrb[0].mxu0
    %v285 = vadd.f32 %v216, %v284
    %v286 = vpop.f32.mrb[0].mxu0
    %287 = vdwg.mxu0
    %v288 = vmax.f32 %v285, 0.0
    %v289 = vld [vmem:[#allocation7 + $0x10] sm:$0xff]
    %v290 = vld [vmem:[#allocation7 + $0xc8] sm:$0xff]
    %v291 = vld [vmem:[#allocation7 + $0x180] sm:$0xff]
    %v292 = vld [vmem:[#allocation7 + $0x238] sm:$0xff]
    %v293 = vld [vmem:[#allocation7 + $0x2f0] sm:$0xff]
    %v294 = vld [vmem:[#allocation7 + $0x3a8] sm:$0xff]
    %v295 = vld [vmem:[#allocation7 + $0x460] sm:$0xff]
    %v296 = vld [vmem:[#allocation7 + $0x518] sm:$0xff]
    %v297 = vld [vmem:[#allocation7 + $0x5d0] sm:$0xff]
    %v298 = vld [vmem:[#allocation7 + $0x688] sm:$0xff]
    %v299 = vld [vmem:[#allocation7 + $0x740] sm:$0xff]
    %v300 = vld [vmem:[#allocation7 + $0x7f8] sm:$0xff]
    %v301 = vld [vmem:[#allocation7 + $0x8b0] sm:$0xff]
    %v302 = vld [vmem:[#allocation7 + $0x968] sm:$0xff]
    %v303 = vld [vmem:[#allocation7 + $0xa20] sm:$0xff]
    %v304 = vld [vmem:[#allocation7 + $0xad8] sm:$0xff]
    %v305 = vld [vmem:[#allocation8 + $0x2] sm:$0x1]
    %v307 = vlaneseq
    %v308 = vshrl.u32 %v307, 7
    %v309 = vsub.s32 0, %v308
    %v310 = vrot.slane %v305, %v309
    %312 = vmatprep.subr.mxu0 0.0
    %313 = vmatpush1.msra.mxu0 %v289
    %314 = vmatprep.subr.mxu0 0.0
    %315 = vmatpush1.msra.mxu0 %v290
    %316 = vmatprep.subr.mxu0 0.0
    %317 = vmatpush1.msra.mxu0 %v291
    %318 = vmatprep.subr.mxu0 0.0
    %319 = vmatpush1.msra.mxu0 %v292
    %320 = vmatprep.subr.mxu0 0.0
    %321 = vmatpush1.msra.mxu0 %v293
    %322 = vmatprep.subr.mxu0 0.0
    %323 = vmatpush1.msra.mxu0 %v294
    %324 = vmatprep.subr.mxu0 0.0
    %325 = vmatpush1.msra.mxu0 %v295
    %326 = vmatprep.subr.mxu0 0.0
    %327 = vmatpush1.msra.mxu0 %v296
    %328 = vmatprep.subr.mxu0 0.0
    %329 = vmatpush1.msra.mxu0 %v297
    %330 = vmatprep.subr.mxu0 0.0
    %331 = vmatpush1.msra.mxu0 %v298
    %332 = vmatprep.subr.mxu0 0.0
    %333 = vmatpush1.msra.mxu0 %v299
    %334 = vmatprep.subr.mxu0 0.0
    %335 = vmatpush1.msra.mxu0 %v300
    %336 = vmatprep.subr.mxu0 0.0
    %337 = vmatpush1.msra.mxu0 %v301
    %338 = vmatprep.subr.mxu0 0.0
    %339 = vmatpush1.msra.mxu0 %v302
    %340 = vmatprep.subr.mxu0 0.0
    %341 = vmatpush1.msra.mxu0 %v303
    %342 = vmatprep.subr.mxu0 0.0
    %343 = vmatpush1.msra.mxu0 %v304
    %344 = vmatprep.subr.mxu0 0.0
    %345 = vmatpush1.msra.mxu0 0.0
    %346 = vmatprep.subr.mxu0 0.0
    %347 = vmatpush1.msra.mxu0 0.0
    %348 = vmatprep.subr.mxu0 0.0
    %349 = vmatpush1.msra.mxu0 0.0
    %350 = vmatprep.subr.mxu0 0.0
    %351 = vmatpush1.msra.mxu0 0.0
    %352 = vmatprep.subr.mxu0 0.0
    %353 = vmatpush1.msra.mxu0 0.0
    %354 = vmatprep.subr.mxu0 0.0
    %355 = vmatpush1.msra.mxu0 0.0
    %356 = vmatprep.subr.mxu0 0.0
    %357 = vmatpush1.msra.mxu0 0.0
    %358 = vmatprep.subr.mxu0 0.0
    %359 = vmatpush1.msra.mxu0 0.0
    %360 = vmatprep.subr.mxu0 0.0
    %361 = vmatpush1.msra.mxu0 0.0
    %362 = vmatprep.subr.mxu0 0.0
    %363 = vmatpush1.msra.mxu0 0.0
    %364 = vmatprep.subr.mxu0 0.0
    %365 = vmatpush1.msra.mxu0 0.0
    %366 = vmatprep.subr.mxu0 0.0
    %367 = vmatpush1.msra.mxu0 0.0
    %368 = vmatprep.subr.mxu0 0.0
    %369 = vmatpush1.msra.mxu0 0.0
    %370 = vmatprep.subr.mxu0 0.0
    %371 = vmatpush1.msra.mxu0 0.0
    %372 = vmatprep.subr.mxu0 0.0
    %373 = vmatpush1.msra.mxu0 0.0
    %374 = vmatprep.subr.mxu0 0.0
    %375 = vmatpush1.msra.mxu0 0.0
    %376 = vmatprep.mubr.f32.mxu0 0.0
    %377 = vmatmul.mubr.f32.gmra.mrb[0].mxu0 %v288
    %v378 = vpop.f32.mrb[0].mxu0
    %v379 = vadd.f32 %v310, %v378
    %v380 = vpop.f32.mrb[0].mxu0
    %381 = vdwg.mxu0
    %v382 = vadd.f32 %v191, %v379
    %v383 = vmax.f32 %v382, 0.0
    %v384 = vld [vmem:[#allocation7 + $0x18] sm:$0xff]
    %v385 = vld [vmem:[#allocation7 + $0xd0] sm:$0xff]
    %v386 = vld [vmem:[#allocation7 + $0x188] sm:$0xff]
    %v387 = vld [vmem:[#allocation7 + $0x240] sm:$0xff]
    %v388 = vld [vmem:[#allocation7 + $0x2f8] sm:$0xff]
    %v389 = vld [vmem:[#allocation7 + $0x3b0] sm:$0xff]
    %v390 = vld [vmem:[#allocation7 + $0x468] sm:$0xff]
    %v391 = vld [vmem:[#allocation7 + $0x520] sm:$0xff]
    %v392 = vld [vmem:[#allocation7 + $0x5d8] sm:$0xff]
    %v393 = vld [vmem:[#allocation7 + $0x690] sm:$0xff]
    %v394 = vld [vmem:[#allocation7 + $0x748] sm:$0xff]
    %v395 = vld [vmem:[#allocation7 + $0x800] sm:$0xff]
    %v396 = vld [vmem:[#allocation7 + $0x8b8] sm:$0xff]
    %v397 = vld [vmem:[#allocation7 + $0x970] sm:$0xff]
    %v398 = vld [vmem:[#allocation7 + $0xa28] sm:$0xff]
    %v399 = vld [vmem:[#allocation7 + $0xae0] sm:$0xff]
    %v400 = vld [vmem:[#allocation8 + $0x3] sm:$0x1]
    %v402 = vlaneseq
    %v403 = vshrl.u32 %v402, 7
    %v404 = vsub.s32 0, %v403
    %v405 = vrot.slane %v400, %v404
    %407 = vmatprep.subr.mxu0 0.0
    %408 = vmatpush1.msra.mxu0 %v384
    %409 = vmatprep.subr.mxu0 0.0
    %410 = vmatpush1.msra.mxu0 %v385
    %411 = vmatprep.subr.mxu0 0.0
    %412 = vmatpush1.msra.mxu0 %v386
    %413 = vmatprep.subr.mxu0 0.0
    %414 = vmatpush1.msra.mxu0 %v387
    %415 = vmatprep.subr.mxu0 0.0
    %416 = vmatpush1.msra.mxu0 %v388
    %417 = vmatprep.subr.mxu0 0.0
    %418 = vmatpush1.msra.mxu0 %v389
    %419 = vmatprep.subr.mxu0 0.0
    %420 = vmatpush1.msra.mxu0 %v390
    %421 = vmatprep.subr.mxu0 0.0
    %422 = vmatpush1.msra.mxu0 %v391
    %423 = vmatprep.subr.mxu0 0.0
    %424 = vmatpush1.msra.mxu0 %v392
    %425 = vmatprep.subr.mxu0 0.0
    %426 = vmatpush1.msra.mxu0 %v393
    %427 = vmatprep.subr.mxu0 0.0
    %428 = vmatpush1.msra.mxu0 %v394
    %429 = vmatprep.subr.mxu0 0.0
    %430 = vmatpush1.msra.mxu0 %v395
    %431 = vmatprep.subr.mxu0 0.0
    %432 = vmatpush1.msra.mxu0 %v396
    %433 = vmatprep.subr.mxu0 0.0
    %434 = vmatpush1.msra.mxu0 %v397
    %435 = vmatprep.subr.mxu0 0.0
    %436 = vmatpush1.msra.mxu0 %v398
    %437 = vmatprep.subr.mxu0 0.0
    %438 = vmatpush1.msra.mxu0 %v399
    %439 = vmatprep.subr.mxu0 0.0
    %440 = vmatpush1.msra.mxu0 0.0
    %441 = vmatprep.subr.mxu0 0.0
    %442 = vmatpush1.msra.mxu0 0.0
    %443 = vmatprep.subr.mxu0 0.0
    %444 = vmatpush1.msra.mxu0 0.0
    %445 = vmatprep.subr.mxu0 0.0
    %446 = vmatpush1.msra.mxu0 0.0
    %447 = vmatprep.subr.mxu0 0.0
    %448 = vmatpush1.msra.mxu0 0.0
    %449 = vmatprep.subr.mxu0 0.0
    %450 = vmatpush1.msra.mxu0 0.0
    %451 = vmatprep.subr.mxu0 0.0
    %452 = vmatpush1.msra.mxu0 0.0
    %453 = vmatprep.subr.mxu0 0.0
    %454 = vmatpush1.msra.mxu0 0.0
    %455 = vmatprep.subr.mxu0 0.0
    %456 = vmatpush1.msra.mxu0 0.0
    %457 = vmatprep.subr.mxu0 0.0
    %458 = vmatpush1.msra.mxu0 0.0
    %459 = vmatprep.subr.mxu0 0.0
    %460 = vmatpush1.msra.mxu0 0.0
    %461 = vmatprep.subr.mxu0 0.0
    %462 = vmatpush1.msra.mxu0 0.0
    %463 = vmatprep.subr.mxu0 0.0
    %464 = vmatpush1.msra.mxu0 0.0
    %465 = vmatprep.subr.mxu0 0.0
    %466 = vmatpush1.msra.mxu0 0.0
    %467 = vmatprep.subr.mxu0 0.0
    %468 = vmatpush1.msra.mxu0 0.0
    %469 = vmatprep.subr.mxu0 0.0
    %470 = vmatpush1.msra.mxu0 0.0
    %471 = vmatprep.mubr.f32.mxu0 0.0
    %472 = vmatmul.mubr.f32.gmra.mrb[0].mxu0 %v383
    %v473 = vpop.f32.mrb[0].mxu0
    %v474 = vadd.f32 %v405, %v473
    %v475 = vpop.f32.mrb[0].mxu0
    %476 = vdwg.mxu0
    %v477 = vmax.f32 %v474, 0.0
    %v478 = vld [vmem:[#allocation7 + $0x20] sm:$0xff]
    %v479 = vld [vmem:[#allocation7 + $0xd8] sm:$0xff]
    %v480 = vld [vmem:[#allocation7 + $0x190] sm:$0xff]
    %v481 = vld [vmem:[#allocation7 + $0x248] sm:$0xff]
    %v482 = vld [vmem:[#allocation7 + $0x300] sm:$0xff]
    %v483 = vld [vmem:[#allocation7 + $0x3b8] sm:$0xff]
    %v484 = vld [vmem:[#allocation7 + $0x470] sm:$0xff]
    %v485 = vld [vmem:[#allocation7 + $0x528] sm:$0xff]
    %v486 = vld [vmem:[#allocation7 + $0x5e0] sm:$0xff]
    %v487 = vld [vmem:[#allocation7 + $0x698] sm:$0xff]
    %v488 = vld [vmem:[#allocation7 + $0x750] sm:$0xff]
    %v489 = vld [vmem:[#allocation7 + $0x808] sm:$0xff]
    %v490 = vld [vmem:[#allocation7 + $0x8c0] sm:$0xff]
    %v491 = vld [vmem:[#allocation7 + $0x978] sm:$0xff]
    %v492 = vld [vmem:[#allocation7 + $0xa30] sm:$0xff]
    %v493 = vld [vmem:[#allocation7 + $0xae8] sm:$0xff]
    %v494 = vld [vmem:[#allocation8 + $0x4] sm:$0x1]
    %v496 = vlaneseq
    %v497 = vshrl.u32 %v496, 7
    %v498 = vsub.s32 0, %v497
    %v499 = vrot.slane %v494, %v498
    %501 = vmatprep.subr.mxu0 0.0
    %502 = vmatpush1.msra.mxu0 %v478
    %503 = vmatprep.subr.mxu0 0.0
    %504 = vmatpush1.msra.mxu0 %v479
    %505 = vmatprep.subr.mxu0 0.0
    %506 = vmatpush1.msra.mxu0 %v480
    %507 = vmatprep.subr.mxu0 0.0
    %508 = vmatpush1.msra.mxu0 %v481
    %509 = vmatprep.subr.mxu0 0.0
    %510 = vmatpush1.msra.mxu0 %v482
    %511 = vmatprep.subr.mxu0 0.0
    %512 = vmatpush1.msra.mxu0 %v483
    %513 = vmatprep.subr.mxu0 0.0
    %514 = vmatpush1.msra.mxu0 %v484
    %515 = vmatprep.subr.mxu0 0.0
    %516 = vmatpush1.msra.mxu0 %v485
    %517 = vmatprep.subr.mxu0 0.0
    %518 = vmatpush1.msra.mxu0 %v486
    %519 = vmatprep.subr.mxu0 0.0
    %520 = vmatpush1.msra.mxu0 %v487
    %521 = vmatprep.subr.mxu0 0.0
    %522 = vmatpush1.msra.mxu0 %v488
    %523 = vmatprep.subr.mxu0 0.0
    %524 = vmatpush1.msra.mxu0 %v489
    %525 = vmatprep.subr.mxu0 0.0
    %526 = vmatpush1.msra.mxu0 %v490
    %527 = vmatprep.subr.mxu0 0.0
    %528 = vmatpush1.msra.mxu0 %v491
    %529 = vmatprep.subr.mxu0 0.0
    %530 = vmatpush1.msra.mxu0 %v492
    %531 = vmatprep.subr.mxu0 0.0
    %532 = vmatpush1.msra.mxu0 %v493
    %533 = vmatprep.subr.mxu0 0.0
    %534 = vmatpush1.msra.mxu0 0.0
    %535 = vmatprep.subr.mxu0 0.0
    %536 = vmatpush1.msra.mxu0 0.0
    %537 = vmatprep.subr.mxu0 0.0
    %538 = vmatpush1.msra.mxu0 0.0
    %539 = vmatprep.subr.mxu0 0.0
    %540 = vmatpush1.msra.mxu0 0.0
    %541 = vmatprep.subr.mxu0 0.0
    %542 = vmatpush1.msra.mxu0 0.0
    %543 = vmatprep.subr.mxu0 0.0
    %544 = vmatpush1.msra.mxu0 0.0
    %545 = vmatprep.subr.mxu0 0.0
    %546 = vmatpush1.msra.mxu0 0.0
    %547 = vmatprep.subr.mxu0 0.0
    %548 = vmatpush1.msra.mxu0 0.0
    %549 = vmatprep.subr.mxu0 0.0
    %550 = vmatpush1.msra.mxu0 0.0
    %551 = vmatprep.subr.mxu0 0.0
    %552 = vmatpush1.msra.mxu0 0.0
    %553 = vmatprep.subr.mxu0 0.0
    %554 = vmatpush1.msra.mxu0 0.0
    %555 = vmatprep.subr.mxu0 0.0
    %556 = vmatpush1.msra.mxu0 0.0
    %557 = vmatprep.subr.mxu0 0.0
    %558 = vmatpush1.msra.mxu0 0.0
    %559 = vmatprep.subr.mxu0 0.0
    %560 = vmatpush1.msra.mxu0 0.0
    %561 = vmatprep.subr.mxu0 0.0
    %562 = vmatpush1.msra.mxu0 0.0
    %563 = vmatprep.subr.mxu0 0.0
    %564 = vmatpush1.msra.mxu0 0.0
    %565 = vmatprep.mubr.f32.mxu0 0.0
    %566 = vmatmul.mubr.f32.gmra.mrb[0].mxu0 %v477
    %v567 = vpop.f32.mrb[0].mxu0
    %v568 = vadd.f32 %v499, %v567
    %v569 = vpop.f32.mrb[0].mxu0
    %570 = vdwg.mxu0
    %v571 = vadd.f32 %v382, %v568
    %v572 = vld [vmem:[#allocation7 + $0x28] sm:$0xff]
    %v573 = vld [vmem:[#allocation7 + $0xe0] sm:$0xff]
    %v574 = vld [vmem:[#allocation7 + $0x198] sm:$0xff]
    %v575 = vld [vmem:[#allocation7 + $0x250] sm:$0xff]
    %v576 = vld [vmem:[#allocation7 + $0x308] sm:$0xff]
    %v577 = vld [vmem:[#allocation7 + $0x3c0] sm:$0xff]
    %v578 = vld [vmem:[#allocation7 + $0x478] sm:$0xff]
    %v579 = vld [vmem:[#allocation7 + $0x530] sm:$0xff]
    %v580 = vld [vmem:[#allocation7 + $0x5e8] sm:$0xff]
    %v581 = vld [vmem:[#allocation7 + $0x6a0] sm:$0xff]
    %v582 = vld [vmem:[#allocation7 + $0x758] sm:$0xff]
    %v583 = vld [vmem:[#allocation7 + $0x810] sm:$0xff]
    %v584 = vld [vmem:[#allocation7 + $0x8c8] sm:$0xff]
    %v585 = vld [vmem:[#allocation7 + $0x980] sm:$0xff]
    %v586 = vld [vmem:[#allocation7 + $0xa38] sm:$0xff]
    %v587 = vld [vmem:[#allocation7 + $0xaf0] sm:$0xff]
    %v588 = vld [vmem:[#allocation8 + $0x5] sm:$0x1]
    %v590 = vlaneseq
    %v591 = vshrl.u32 %v590, 7
    %v592 = vsub.s32 0, %v591
    %v593 = vrot.slane %v588, %v592
    %595 = vmatprep.subr.mxu0 0.0
    %596 = vmatpush1.msra.mxu0 %v572
    %597 = vmatprep.subr.mxu0 0.0
    %598 = vmatpush1.msra.mxu0 %v573
    %599 = vmatprep.subr.mxu0 0.0
    %600 = vmatpush1.msra.mxu0 %v574
    %601 = vmatprep.subr.mxu0 0.0
    %602 = vmatpush1.msra.mxu0 %v575
    %603 = vmatprep.subr.mxu0 0.0
    %604 = vmatpush1.msra.mxu0 %v576
    %605 = vmatprep.subr.mxu0 0.0
    %606 = vmatpush1.msra.mxu0 %v577
    %607 = vmatprep.subr.mxu0 0.0
    %608 = vmatpush1.msra.mxu0 %v578
    %609 = vmatprep.subr.mxu0 0.0
    %610 = vmatpush1.msra.mxu0 %v579
    %611 = vmatprep.subr.mxu0 0.0
    %612 = vmatpush1.msra.mxu0 %v580
    %613 = vmatprep.subr.mxu0 0.0
    %614 = vmatpush1.msra.mxu0 %v581
    %615 = vmatprep.subr.mxu0 0.0
    %616 = vmatpush1.msra.mxu0 %v582
    %617 = vmatprep.subr.mxu0 0.0
    %618 = vmatpush1.msra.mxu0 %v583
    %619 = vmatprep.subr.mxu0 0.0
    %620 = vmatpush1.msra.mxu0 %v584
    %621 = vmatprep.subr.mxu0 0.0
    %622 = vmatpush1.msra.mxu0 %v585
    %623 = vmatprep.subr.mxu0 0.0
    %624 = vmatpush1.msra.mxu0 %v586
    %625 = vmatprep.subr.mxu0 0.0
    %626 = vmatpush1.msra.mxu0 %v587
    %627 = vmatprep.subr.mxu0 0.0
    %628 = vmatpush1.msra.mxu0 0.0
    %629 = vmatprep.subr.mxu0 0.0
    %630 = vmatpush1.msra.mxu0 0.0
    %631 = vmatprep.subr.mxu0 0.0
    %632 = vmatpush1.msra.mxu0 0.0
    %633 = vmatprep.subr.mxu0 0.0
    %634 = vmatpush1.msra.mxu0 0.0
    %635 = vmatprep.subr.mxu0 0.0
    %636 = vmatpush1.msra.mxu0 0.0
    %637 = vmatprep.subr.mxu0 0.0
    %638 = vmatpush1.msra.mxu0 0.0
    %639 = vmatprep.subr.mxu0 0.0
    %640 = vmatpush1.msra.mxu0 0.0
    %641 = vmatprep.subr.mxu0 0.0
    %642 = vmatpush1.msra.mxu0 0.0
    %643 = vmatprep.subr.mxu0 0.0
    %644 = vmatpush1.msra.mxu0 0.0
    %645 = vmatprep.subr.mxu0 0.0
    %646 = vmatpush1.msra.mxu0 0.0
    %647 = vmatprep.subr.mxu0 0.0
    %648 = vmatpush1.msra.mxu0 0.0
    %649 = vmatprep.subr.mxu0 0.0
    %650 = vmatpush1.msra.mxu0 0.0
    %651 = vmatprep.subr.mxu0 0.0
    %652 = vmatpush1.msra.mxu0 0.0
    %653 = vmatprep.subr.mxu0 0.0
    %654 = vmatpush1.msra.mxu0 0.0
    %655 = vmatprep.subr.mxu0 0.0
    %656 = vmatpush1.msra.mxu0 0.0
    %657 = vmatprep.subr.mxu0 0.0
    %658 = vmatpush1.msra.mxu0 0.0
    %659 = vmatprep.mubr.f32.mxu0 0.0
    %660 = vmatmul.mubr.f32.gmra.mrb[0].mxu0 %v571
    %v661 = vpop.f32.mrb[0].mxu0
    %v662 = vadd.f32 %v593, %v661
    %v663 = vpop.f32.mrb[0].mxu0
    %664 = vdwg.mxu0
    %v665 = vmax.f32 %v662, 0.0
    %v666 = vld [vmem:[#allocation7 + $0x30] sm:$0xff]
    %v667 = vld [vmem:[#allocation7 + $0xe8] sm:$0xff]
    %v668 = vld [vmem:[#allocation7 + $0x1a0] sm:$0xff]
    %v669 = vld [vmem:[#allocation7 + $0x258] sm:$0xff]
    %v670 = vld [vmem:[#allocation7 + $0x310] sm:$0xff]
    %v671 = vld [vmem:[#allocation7 + $0x3c8] sm:$0xff]
    %v672 = vld [vmem:[#allocation7 + $0x480] sm:$0xff]
    %v673 = vld [vmem:[#allocation7 + $0x538] sm:$0xff]
    %v674 = vld [vmem:[#allocation7 + $0x5f0] sm:$0xff]
    %v675 = vld [vmem:[#allocation7 + $0x6a8] sm:$0xff]
    %v676 = vld [vmem:[#allocation7 + $0x760] sm:$0xff]
    %v677 = vld [vmem:[#allocation7 + $0x818] sm:$0xff]
    %v678 = vld [vmem:[#allocation7 + $0x8d0] sm:$0xff]
    %v679 = vld [vmem:[#allocation7 + $0x988] sm:$0xff]
    %v680 = vld [vmem:[#allocation7 + $0xa40] sm:$0xff]
    %v681 = vld [vmem:[#allocation7 + $0xaf8] sm:$0xff]
    %v682 = vld [vmem:[#allocation8 + $0x6] sm:$0x1]
    %v684 = vlaneseq
    %v685 = vshrl.u32 %v684, 7
    %v686 = vsub.s32 0, %v685
    %v687 = vrot.slane %v682, %v686
    %689 = vmatprep.subr.mxu0 0.0
    %690 = vmatpush1.msra.mxu0 %v666
    %691 = vmatprep.subr.mxu0 0.0
    %692 = vmatpush1.msra.mxu0 %v667
    %693 = vmatprep.subr.mxu0 0.0
    %694 = vmatpush1.msra.mxu0 %v668
    %695 = vmatprep.subr.mxu0 0.0
    %696 = vmatpush1.msra.mxu0 %v669
    %697 = vmatprep.subr.mxu0 0.0
    %698 = vmatpush1.msra.mxu0 %v670
    %699 = vmatprep.subr.mxu0 0.0
    %700 = vmatpush1.msra.mxu0 %v671
    %701 = vmatprep.subr.mxu0 0.0
    %702 = vmatpush1.msra.mxu0 %v672
    %703 = vmatprep.subr.mxu0 0.0
    %704 = vmatpush1.msra.mxu0 %v673
    %705 = vmatprep.subr.mxu0 0.0
    %706 = vmatpush1.msra.mxu0 %v674
    %707 = vmatprep.subr.mxu0 0.0
    %708 = vmatpush1.msra.mxu0 %v675
    %709 = vmatprep.subr.mxu0 0.0
    %710 = vmatpush1.msra.mxu0 %v676
    %711 = vmatprep.subr.mxu0 0.0
    %712 = vmatpush1.msra.mxu0 %v677
    %713 = vmatprep.subr.mxu0 0.0
    %714 = vmatpush1.msra.mxu0 %v678
    %715 = vmatprep.subr.mxu0 0.0
    %716 = vmatpush1.msra.mxu0 %v679
    %717 = vmatprep.subr.mxu0 0.0
    %718 = vmatpush1.msra.mxu0 %v680
    %719 = vmatprep.subr.mxu0 0.0
    %720 = vmatpush1.msra.mxu0 %v681
    %721 = vmatprep.subr.mxu0 0.0
    %722 = vmatpush1.msra.mxu0 0.0
    %723 = vmatprep.subr.mxu0 0.0
    %724 = vmatpush1.msra.mxu0 0.0
    %725 = vmatprep.subr.mxu0 0.0
    %726 = vmatpush1.msra.mxu0 0.0
    %727 = vmatprep.subr.mxu0 0.0
    %728 = vmatpush1.msra.mxu0 0.0
    %729 = vmatprep.subr.mxu0 0.0
    %730 = vmatpush1.msra.mxu0 0.0
    %731 = vmatprep.subr.mxu0 0.0
    %732 = vmatpush1.msra.mxu0 0.0
    %733 = vmatprep.subr.mxu0 0.0
    %734 = vmatpush1.msra.mxu0 0.0
    %735 = vmatprep.subr.mxu0 0.0
    %736 = vmatpush1.msra.mxu0 0.0
    %737 = vmatprep.subr.mxu0 0.0
    %738 = vmatpush1.msra.mxu0 0.0
    %739 = vmatprep.subr.mxu0 0.0
    %740 = vmatpush1.msra.mxu0 0.0
    %741 = vmatprep.subr.mxu0 0.0
    %742 = vmatpush1.msra.mxu0 0.0
    %743 = vmatprep.subr.mxu0 0.0
    %744 = vmatpush1.msra.mxu0 0.0
    %745 = vmatprep.subr.mxu0 0.0
    %746 = vmatpush1.msra.mxu0 0.0
    %747 = vmatprep.subr.mxu0 0.0
    %748 = vmatpush1.msra.mxu0 0.0
    %749 = vmatprep.subr.mxu0 0.0
    %750 = vmatpush1.msra.mxu0 0.0
    %751 = vmatprep.subr.mxu0 0.0
    %752 = vmatpush1.msra.mxu0 0.0
    %753 = vmatprep.mubr.f32.mxu0 0.0
    %754 = vmatmul.mubr.f32.gmra.mrb[0].mxu0 %v665
    %v755 = vpop.f32.mrb[0].mxu0
    %v756 = vadd.f32 %v687, %v755
    %v757 = vpop.f32.mrb[0].mxu0
    %758 = vdwg.mxu0
    %v759 = vmax.f32 %v756, 0.0
    %v760 = vld [vmem:[#allocation7 + $0x38] sm:$0xff]
    %v761 = vld [vmem:[#allocation7 + $0xf0] sm:$0xff]
    %v762 = vld [vmem:[#allocation7 + $0x1a8] sm:$0xff]
    %v763 = vld [vmem:[#allocation7 + $0x260] sm:$0xff]
    %v764 = vld [vmem:[#allocation7 + $0x318] sm:$0xff]
    %v765 = vld [vmem:[#allocation7 + $0x3d0] sm:$0xff]
    %v766 = vld [vmem:[#allocation7 + $0x488] sm:$0xff]
    %v767 = vld [vmem:[#allocation7 + $0x540] sm:$0xff]
    %v768 = vld [vmem:[#allocation7 + $0x5f8] sm:$0xff]
    %v769 = vld [vmem:[#allocation7 + $0x6b0] sm:$0xff]
    %v770 = vld [vmem:[#allocation7 + $0x768] sm:$0xff]
    %v771 = vld [vmem:[#allocation7 + $0x820] sm:$0xff]
    %v772 = vld [vmem:[#allocation7 + $0x8d8] sm:$0xff]
    %v773 = vld [vmem:[#allocation7 + $0x990] sm:$0xff]
    %v774 = vld [vmem:[#allocation7 + $0xa48] sm:$0xff]
    %v775 = vld [vmem:[#allocation7 + $0xb00] sm:$0xff]
    %v776 = vld [vmem:[#allocation8 + $0x7] sm:$0x1]
    %v778 = vlaneseq
    %v779 = vshrl.u32 %v778, 7
    %v780 = vsub.s32 0, %v779
    %v781 = vrot.slane %v776, %v780
    %783 = vmatprep.subr.mxu0 0.0
    %784 = vmatpush1.msra.mxu0 %v760
    %785 = vmatprep.subr.mxu0 0.0
    %786 = vmatpush1.msra.mxu0 %v761
    %787 = vmatprep.subr.mxu0 0.0
    %788 = vmatpush1.msra.mxu0 %v762
    %789 = vmatprep.subr.mxu0 0.0
    %790 = vmatpush1.msra.mxu0 %v763
    %791 = vmatprep.subr.mxu0 0.0
    %792 = vmatpush1.msra.mxu0 %v764
    %793 = vmatprep.subr.mxu0 0.0
    %794 = vmatpush1.msra.mxu0 %v765
    %795 = vmatprep.subr.mxu0 0.0
    %796 = vmatpush1.msra.mxu0 %v766
    %797 = vmatprep.subr.mxu0 0.0
    %798 = vmatpush1.msra.mxu0 %v767
    %799 = vmatprep.subr.mxu0 0.0
    %800 = vmatpush1.msra.mxu0 %v768
    %801 = vmatprep.subr.mxu0 0.0
    %802 = vmatpush1.msra.mxu0 %v769
    %803 = vmatprep.subr.mxu0 0.0
    %804 = vmatpush1.msra.mxu0 %v770
    %805 = vmatprep.subr.mxu0 0.0
    %806 = vmatpush1.msra.mxu0 %v771
    %807 = vmatprep.subr.mxu0 0.0
    %808 = vmatpush1.msra.mxu0 %v772
    %809 = vmatprep.subr.mxu0 0.0
    %810 = vmatpush1.msra.mxu0 %v773
    %811 = vmatprep.subr.mxu0 0.0
    %812 = vmatpush1.msra.mxu0 %v774
    %813 = vmatprep.subr.mxu0 0.0
    %814 = vmatpush1.msra.mxu0 %v775
    %815 = vmatprep.subr.mxu0 0.0
    %816 = vmatpush1.msra.mxu0 0.0
    %817 = vmatprep.subr.mxu0 0.0
    %818 = vmatpush1.msra.mxu0 0.0
    %819 = vmatprep.subr.mxu0 0.0
    %820 = vmatpush1.msra.mxu0 0.0
    %821 = vmatprep.subr.mxu0 0.0
    %822 = vmatpush1.msra.mxu0 0.0
    %823 = vmatprep.subr.mxu0 0.0
    %824 = vmatpush1.msra.mxu0 0.0
    %825 = vmatprep.subr.mxu0 0.0
    %826 = vmatpush1.msra.mxu0 0.0
    %827 = vmatprep.subr.mxu0 0.0
    %828 = vmatpush1.msra.mxu0 0.0
    %829 = vmatprep.subr.mxu0 0.0
    %830 = vmatpush1.msra.mxu0 0.0
    %831 = vmatprep.subr.mxu0 0.0
    %832 = vmatpush1.msra.mxu0 0.0
    %833 = vmatprep.subr.mxu0 0.0
    %834 = vmatpush1.msra.mxu0 0.0
    %835 = vmatprep.subr.mxu0 0.0
    %836 = vmatpush1.msra.mxu0 0.0
    %837 = vmatprep.subr.mxu0 0.0
    %838 = vmatpush1.msra.mxu0 0.0
    %839 = vmatprep.subr.mxu0 0.0
    %840 = vmatpush1.msra.mxu0 0.0
    %841 = vmatprep.subr.mxu0 0.0
    %842 = vmatpush1.msra.mxu0 0.0
    %843 = vmatprep.subr.mxu0 0.0
    %844 = vmatpush1.msra.mxu0 0.0
    %845 = vmatprep.subr.mxu0 0.0
    %846 = vmatpush1.msra.mxu0 0.0
    %847 = vmatprep.mubr.f32.mxu0 0.0
    %848 = vmatmul.mubr.f32.gmra.mrb[0].mxu0 %v759
    %v849 = vpop.f32.mrb[0].mxu0
    %v850 = vadd.f32 %v781, %v849
    %v851 = vpop.f32.mrb[0].mxu0
    %852 = vdwg.mxu0
    %v853 = vadd.f32 %v662, %v850
    %v854 = vmax.f32 %v853, 0.0
    %v855 = vld [vmem:[#allocation7 + $0x40] sm:$0xff]
    %v856 = vld [vmem:[#allocation7 + $0xf8] sm:$0xff]
    %v857 = vld [vmem:[#allocation7 + $0x1b0] sm:$0xff]
    %v858 = vld [vmem:[#allocation7 + $0x268] sm:$0xff]
    %v859 = vld [vmem:[#allocation7 + $0x320] sm:$0xff]
    %v860 = vld [vmem:[#allocation7 + $0x3d8] sm:$0xff]
    %v861 = vld [vmem:[#allocation7 + $0x490] sm:$0xff]
    %v862 = vld [vmem:[#allocation7 + $0x548] sm:$0xff]
    %v863 = vld [vmem:[#allocation7 + $0x600] sm:$0xff]
    %v864 = vld [vmem:[#allocation7 + $0x6b8] sm:$0xff]
    %v865 = vld [vmem:[#allocation7 + $0x770] sm:$0xff]
    %v866 = vld [vmem:[#allocation7 + $0x828] sm:$0xff]
    %v867 = vld [vmem:[#allocation7 + $0x8e0] sm:$0xff]
    %v868 = vld [vmem:[#allocation7 + $0x998] sm:$0xff]
    %v869 = vld [vmem:[#allocation7 + $0xa50] sm:$0xff]
    %v870 = vld [vmem:[#allocation7 + $0xb08] sm:$0xff]
    %v871 = vld [vmem:[#allocation8 + $0x8] sm:$0x1]
    %v873 = vlaneseq
    %v874 = vshrl.u32 %v873, 7
    %v875 = vsub.s32 0, %v874
    %v876 = vrot.slane %v871, %v875
    %878 = vmatprep.subr.mxu0 0.0
    %879 = vmatpush1.msra.mxu0 %v855
    %880 = vmatprep.subr.mxu0 0.0
    %881 = vmatpush1.msra.mxu0 %v856
    %882 = vmatprep.subr.mxu0 0.0
    %883 = vmatpush1.msra.mxu0 %v857
    %884 = vmatprep.subr.mxu0 0.0
    %885 = vmatpush1.msra.mxu0 %v858
    %886 = vmatprep.subr.mxu0 0.0
    %887 = vmatpush1.msra.mxu0 %v859
    %888 = vmatprep.subr.mxu0 0.0
    %889 = vmatpush1.msra.mxu0 %v860
    %890 = vmatprep.subr.mxu0 0.0
    %891 = vmatpush1.msra.mxu0 %v861
    %892 = vmatprep.subr.mxu0 0.0
    %893 = vmatpush1.msra.mxu0 %v862
    %894 = vmatprep.subr.mxu0 0.0
    %895 = vmatpush1.msra.mxu0 %v863
    %896 = vmatprep.subr.mxu0 0.0
    %897 = vmatpush1.msra.mxu0 %v864
    %898 = vmatprep.subr.mxu0 0.0
    %899 = vmatpush1.msra.mxu0 %v865
    %900 = vmatprep.subr.mxu0 0.0
    %901 = vmatpush1.msra.mxu0 %v866
    %902 = vmatprep.subr.mxu0 0.0
    %903 = vmatpush1.msra.mxu0 %v867
    %904 = vmatprep.subr.mxu0 0.0
    %905 = vmatpush1.msra.mxu0 %v868
    %906 = vmatprep.subr.mxu0 0.0
    %907 = vmatpush1.msra.mxu0 %v869
    %908 = vmatprep.subr.mxu0 0.0
    %909 = vmatpush1.msra.mxu0 %v870
    %910 = vmatprep.subr.mxu0 0.0
    %911 = vmatpush1.msra.mxu0 0.0
    %912 = vmatprep.subr.mxu0 0.0
    %913 = vmatpush1.msra.mxu0 0.0
    %914 = vmatprep.subr.mxu0 0.0
    %915 = vmatpush1.msra.mxu0 0.0
    %916 = vmatprep.subr.mxu0 0.0
    %917 = vmatpush1.msra.mxu0 0.0
    %918 = vmatprep.subr.mxu0 0.0
    %919 = vmatpush1.msra.mxu0 0.0
    %920 = vmatprep.subr.mxu0 0.0
    %921 = vmatpush1.msra.mxu0 0.0
    %922 = vmatprep.subr.mxu0 0.0
    %923 = vmatpush1.msra.mxu0 0.0
    %924 = vmatprep.subr.mxu0 0.0
    %925 = vmatpush1.msra.mxu0 0.0
    %926 = vmatprep.subr.mxu0 0.0
    %927 = vmatpush1.msra.mxu0 0.0
    %928 = vmatprep.subr.mxu0 0.0
    %929 = vmatpush1.msra.mxu0 0.0
    %930 = vmatprep.subr.mxu0 0.0
    %931 = vmatpush1.msra.mxu0 0.0
    %932 = vmatprep.subr.mxu0 0.0
    %933 = vmatpush1.msra.mxu0 0.0
    %934 = vmatprep.subr.mxu0 0.0
    %935 = vmatpush1.msra.mxu0 0.0
    %936 = vmatprep.subr.mxu0 0.0
    %937 = vmatpush1.msra.mxu0 0.0
    %938 = vmatprep.subr.mxu0 0.0
    %939 = vmatpush1.msra.mxu0 0.0
    %940 = vmatprep.subr.mxu0 0.0
    %941 = vmatpush1.msra.mxu0 0.0
    %942 = vmatprep.mubr.f32.mxu0 0.0
    %943 = vmatmul.mubr.f32.gmra.mrb[0].mxu0 %v854
    %v944 = vpop.f32.mrb[0].mxu0
    %v945 = vadd.f32 %v876, %v944
    %v946 = vpop.f32.mrb[0].mxu0
    %947 = vdwg.mxu0
    %v948 = vmax.f32 %v945, 0.0
    %v949 = vld [vmem:[#allocation7 + $0x48] sm:$0xff]
    %v950 = vld [vmem:[#allocation7 + $0x100] sm:$0xff]
    %v951 = vld [vmem:[#allocation7 + $0x1b8] sm:$0xff]
    %v952 = vld [vmem:[#allocation7 + $0x270] sm:$0xff]
    %v953 = vld [vmem:[#allocation7 + $0x328] sm:$0xff]
    %v954 = vld [vmem:[#allocation7 + $0x3e0] sm:$0xff]
    %v955 = vld [vmem:[#allocation7 + $0x498] sm:$0xff]
    %v956 = vld [vmem:[#allocation7 + $0x550] sm:$0xff]
    %v957 = vld [vmem:[#allocation7 + $0x608] sm:$0xff]
    %v958 = vld [vmem:[#allocation7 + $0x6c0] sm:$0xff]
    %v959 = vld [vmem:[#allocation7 + $0x778] sm:$0xff]
    %v960 = vld [vmem:[#allocation7 + $0x830] sm:$0xff]
    %v961 = vld [vmem:[#allocation7 + $0x8e8] sm:$0xff]
    %v962 = vld [vmem:[#allocation7 + $0x9a0] sm:$0xff]
    %v963 = vld [vmem:[#allocation7 + $0xa58] sm:$0xff]
    %v964 = vld [vmem:[#allocation7 + $0xb10] sm:$0xff]
    %v965 = vld [vmem:[#allocation8 + $0x9] sm:$0x1]
    %v967 = vlaneseq
    %v968 = vshrl.u32 %v967, 7
    %v969 = vsub.s32 0, %v968
    %v970 = vrot.slane %v965, %v969
    %972 = vmatprep.subr.mxu0 0.0
    %973 = vmatpush1.msra.mxu0 %v949
    %974 = vmatprep.subr.mxu0 0.0
    %975 = vmatpush1.msra.mxu0 %v950
    %976 = vmatprep.subr.mxu0 0.0
    %977 = vmatpush1.msra.mxu0 %v951
    %978 = vmatprep.subr.mxu0 0.0
    %979 = vmatpush1.msra.mxu0 %v952
    %980 = vmatprep.subr.mxu0 0.0
    %981 = vmatpush1.msra.mxu0 %v953
    %982 = vmatprep.subr.mxu0 0.0
    %983 = vmatpush1.msra.mxu0 %v954
    %984 = vmatprep.subr.mxu0 0.0
    %985 = vmatpush1.msra.mxu0 %v955
    %986 = vmatprep.subr.mxu0 0.0
    %987 = vmatpush1.msra.mxu0 %v956
    %988 = vmatprep.subr.mxu0 0.0
    %989 = vmatpush1.msra.mxu0 %v957
    %990 = vmatprep.subr.mxu0 0.0
    %991 = vmatpush1.msra.mxu0 %v958
    %992 = vmatprep.subr.mxu0 0.0
    %993 = vmatpush1.msra.mxu0 %v959
    %994 = vmatprep.subr.mxu0 0.0
    %995 = vmatpush1.msra.mxu0 %v960
    %996 = vmatprep.subr.mxu0 0.0
    %997 = vmatpush1.msra.mxu0 %v961
    %998 = vmatprep.subr.mxu0 0.0
    %999 = vmatpush1.msra.mxu0 %v962
    %1000 = vmatprep.subr.mxu0 0.0
    %1001 = vmatpush1.msra.mxu0 %v963
    %1002 = vmatprep.subr.mxu0 0.0
    %1003 = vmatpush1.msra.mxu0 %v964
    %1004 = vmatprep.subr.mxu0 0.0
    %1005 = vmatpush1.msra.mxu0 0.0
    %1006 = vmatprep.subr.mxu0 0.0
    %1007 = vmatpush1.msra.mxu0 0.0
    %1008 = vmatprep.subr.mxu0 0.0
    %1009 = vmatpush1.msra.mxu0 0.0
    %1010 = vmatprep.subr.mxu0 0.0
    %1011 = vmatpush1.msra.mxu0 0.0
    %1012 = vmatprep.subr.mxu0 0.0
    %1013 = vmatpush1.msra.mxu0 0.0
    %1014 = vmatprep.subr.mxu0 0.0
    %1015 = vmatpush1.msra.mxu0 0.0
    %1016 = vmatprep.subr.mxu0 0.0
    %1017 = vmatpush1.msra.mxu0 0.0
    %1018 = vmatprep.subr.mxu0 0.0
    %1019 = vmatpush1.msra.mxu0 0.0
    %1020 = vmatprep.subr.mxu0 0.0
    %1021 = vmatpush1.msra.mxu0 0.0
    %1022 = vmatprep.subr.mxu0 0.0
    %1023 = vmatpush1.msra.mxu0 0.0
    %1024 = vmatprep.subr.mxu0 0.0
    %1025 = vmatpush1.msra.mxu0 0.0
    %1026 = vmatprep.subr.mxu0 0.0
    %1027 = vmatpush1.msra.mxu0 0.0
    %1028 = vmatprep.subr.mxu0 0.0
    %1029 = vmatpush1.msra.mxu0 0.0
    %1030 = vmatprep.subr.mxu0 0.0
    %1031 = vmatpush1.msra.mxu0 0.0
    %1032 = vmatprep.subr.mxu0 0.0
    %1033 = vmatpush1.msra.mxu0 0.0
    %1034 = vmatprep.subr.mxu0 0.0
    %1035 = vmatpush1.msra.mxu0 0.0
    %1036 = vmatprep.mubr.f32.mxu0 0.0
    %1037 = vmatmul.mubr.f32.gmra.mrb[0].mxu0 %v948
    %v1038 = vpop.f32.mrb[0].mxu0
    %v1039 = vadd.f32 %v970, %v1038
    %v1040 = vpop.f32.mrb[0].mxu0
    %1041 = vdwg.mxu0
    %v1042 = vadd.f32 %v853, %v1039
    %v1043 = vld [vmem:[#allocation7 + $0x50] sm:$0xff]
    %v1044 = vld [vmem:[#allocation7 + $0x108] sm:$0xff]
    %v1045 = vld [vmem:[#allocation7 + $0x1c0] sm:$0xff]
    %v1046 = vld [vmem:[#allocation7 + $0x278] sm:$0xff]
    %v1047 = vld [vmem:[#allocation7 + $0x330] sm:$0xff]
    %v1048 = vld [vmem:[#allocation7 + $0x3e8] sm:$0xff]
    %v1049 = vld [vmem:[#allocation7 + $0x4a0] sm:$0xff]
    %v1050 = vld [vmem:[#allocation7 + $0x558] sm:$0xff]
    %v1051 = vld [vmem:[#allocation7 + $0x610] sm:$0xff]
    %v1052 = vld [vmem:[#allocation7 + $0x6c8] sm:$0xff]
    %v1053 = vld [vmem:[#allocation7 + $0x780] sm:$0xff]
    %v1054 = vld [vmem:[#allocation7 + $0x838] sm:$0xff]
    %v1055 = vld [vmem:[#allocation7 + $0x8f0] sm:$0xff]
    %v1056 = vld [vmem:[#allocation7 + $0x9a8] sm:$0xff]
    %v1057 = vld [vmem:[#allocation7 + $0xa60] sm:$0xff]
    %v1058 = vld [vmem:[#allocation7 + $0xb18] sm:$0xff]
    %v1059 = vld [vmem:[#allocation8 + $0xa] sm:$0x1]
    %v1061 = vlaneseq
    %v1062 = vshrl.u32 %v1061, 7
    %v1063 = vsub.s32 0, %v1062
    %v1064 = vrot.slane %v1059, %v1063
    %1066 = vmatprep.subr.mxu0 0.0
    %1067 = vmatpush1.msra.mxu0 %v1043
    %1068 = vmatprep.subr.mxu0 0.0
    %1069 = vmatpush1.msra.mxu0 %v1044
    %1070 = vmatprep.subr.mxu0 0.0
    %1071 = vmatpush1.msra.mxu0 %v1045
    %1072 = vmatprep.subr.mxu0 0.0
    %1073 = vmatpush1.msra.mxu0 %v1046
    %1074 = vmatprep.subr.mxu0 0.0
    %1075 = vmatpush1.msra.mxu0 %v1047
    %1076 = vmatprep.subr.mxu0 0.0
    %1077 = vmatpush1.msra.mxu0 %v1048
    %1078 = vmatprep.subr.mxu0 0.0
    %1079 = vmatpush1.msra.mxu0 %v1049
    %1080 = vmatprep.subr.mxu0 0.0
    %1081 = vmatpush1.msra.mxu0 %v1050
    %1082 = vmatprep.subr.mxu0 0.0
    %1083 = vmatpush1.msra.mxu0 %v1051
    %1084 = vmatprep.subr.mxu0 0.0
    %1085 = vmatpush1.msra.mxu0 %v1052
    %1086 = vmatprep.subr.mxu0 0.0
    %1087 = vmatpush1.msra.mxu0 %v1053
    %1088 = vmatprep.subr.mxu0 0.0
    %1089 = vmatpush1.msra.mxu0 %v1054
    %1090 = vmatprep.subr.mxu0 0.0
    %1091 = vmatpush1.msra.mxu0 %v1055
    %1092 = vmatprep.subr.mxu0 0.0
    %1093 = vmatpush1.msra.mxu0 %v1056
    %1094 = vmatprep.subr.mxu0 0.0
    %1095 = vmatpush1.msra.mxu0 %v1057
    %1096 = vmatprep.subr.mxu0 0.0
    %1097 = vmatpush1.msra.mxu0 %v1058
    %1098 = vmatprep.subr.mxu0 0.0
    %1099 = vmatpush1.msra.mxu0 0.0
    %1100 = vmatprep.subr.mxu0 0.0
    %1101 = vmatpush1.msra.mxu0 0.0
    %1102 = vmatprep.subr.mxu0 0.0
    %1103 = vmatpush1.msra.mxu0 0.0
    %1104 = vmatprep.subr.mxu0 0.0
    %1105 = vmatpush1.msra.mxu0 0.0
    %1106 = vmatprep.subr.mxu0 0.0
    %1107 = vmatpush1.msra.mxu0 0.0
    %1108 = vmatprep.subr.mxu0 0.0
    %1109 = vmatpush1.msra.mxu0 0.0
    %1110 = vmatprep.subr.mxu0 0.0
    %1111 = vmatpush1.msra.mxu0 0.0
    %1112 = vmatprep.subr.mxu0 0.0
    %1113 = vmatpush1.msra.mxu0 0.0
    %1114 = vmatprep.subr.mxu0 0.0
    %1115 = vmatpush1.msra.mxu0 0.0
    %1116 = vmatprep.subr.mxu0 0.0
    %1117 = vmatpush1.msra.mxu0 0.0
    %1118 = vmatprep.subr.mxu0 0.0
    %1119 = vmatpush1.msra.mxu0 0.0
    %1120 = vmatprep.subr.mxu0 0.0
    %1121 = vmatpush1.msra.mxu0 0.0
    %1122 = vmatprep.subr.mxu0 0.0
    %1123 = vmatpush1.msra.mxu0 0.0
    %1124 = vmatprep.subr.mxu0 0.0
    %1125 = vmatpush1.msra.mxu0 0.0
    %1126 = vmatprep.subr.mxu0 0.0
    %1127 = vmatpush1.msra.mxu0 0.0
    %1128 = vmatprep.subr.mxu0 0.0
    %1129 = vmatpush1.msra.mxu0 0.0
    %1130 = vmatprep.mubr.f32.mxu0 0.0
    %1131 = vmatmul.mubr.f32.gmra.mrb[0].mxu0 %v1042
    %v1132 = vpop.f32.mrb[0].mxu0
    %v1133 = vadd.f32 %v1064, %v1132
    %v1134 = vpop.f32.mrb[0].mxu0
    %1135 = vdwg.mxu0
    %v1136 = vmax.f32 %v1133, 0.0
    %v1137 = vld [vmem:[#allocation7 + $0x58] sm:$0xff]
    %v1138 = vld [vmem:[#allocation7 + $0x110] sm:$0xff]
    %v1139 = vld [vmem:[#allocation7 + $0x1c8] sm:$0xff]
    %v1140 = vld [vmem:[#allocation7 + $0x280] sm:$0xff]
    %v1141 = vld [vmem:[#allocation7 + $0x338] sm:$0xff]
    %v1142 = vld [vmem:[#allocation7 + $0x3f0] sm:$0xff]
    %v1143 = vld [vmem:[#allocation7 + $0x4a8] sm:$0xff]
    %v1144 = vld [vmem:[#allocation7 + $0x560] sm:$0xff]
    %v1145 = vld [vmem:[#allocation7 + $0x618] sm:$0xff]
    %v1146 = vld [vmem:[#allocation7 + $0x6d0] sm:$0xff]
    %v1147 = vld [vmem:[#allocation7 + $0x788] sm:$0xff]
    %v1148 = vld [vmem:[#allocation7 + $0x840] sm:$0xff]
    %v1149 = vld [vmem:[#allocation7 + $0x8f8] sm:$0xff]
    %v1150 = vld [vmem:[#allocation7 + $0x9b0] sm:$0xff]
    %v1151 = vld [vmem:[#allocation7 + $0xa68] sm:$0xff]
    %v1152 = vld [vmem:[#allocation7 + $0xb20] sm:$0xff]
    %v1153 = vld [vmem:[#allocation8 + $0xb] sm:$0x1]
    %v1155 = vlaneseq
    %v1156 = vshrl.u32 %v1155, 7
    %v1157 = vsub.s32 0, %v1156
    %v1158 = vrot.slane %v1153, %v1157
    %1160 = vmatprep.subr.mxu0 0.0
    %1161 = vmatpush1.msra.mxu0 %v1137
    %1162 = vmatprep.subr.mxu0 0.0
    %1163 = vmatpush1.msra.mxu0 %v1138
    %1164 = vmatprep.subr.mxu0 0.0
    %1165 = vmatpush1.msra.mxu0 %v1139
    %1166 = vmatprep.subr.mxu0 0.0
    %1167 = vmatpush1.msra.mxu0 %v1140
    %1168 = vmatprep.subr.mxu0 0.0
    %1169 = vmatpush1.msra.mxu0 %v1141
    %1170 = vmatprep.subr.mxu0 0.0
    %1171 = vmatpush1.msra.mxu0 %v1142
    %1172 = vmatprep.subr.mxu0 0.0
    %1173 = vmatpush1.msra.mxu0 %v1143
    %1174 = vmatprep.subr.mxu0 0.0
    %1175 = vmatpush1.msra.mxu0 %v1144
    %1176 = vmatprep.subr.mxu0 0.0
    %1177 = vmatpush1.msra.mxu0 %v1145
    %1178 = vmatprep.subr.mxu0 0.0
    %1179 = vmatpush1.msra.mxu0 %v1146
    %1180 = vmatprep.subr.mxu0 0.0
    %1181 = vmatpush1.msra.mxu0 %v1147
    %1182 = vmatprep.subr.mxu0 0.0
    %1183 = vmatpush1.msra.mxu0 %v1148
    %1184 = vmatprep.subr.mxu0 0.0
    %1185 = vmatpush1.msra.mxu0 %v1149
    %1186 = vmatprep.subr.mxu0 0.0
    %1187 = vmatpush1.msra.mxu0 %v1150
    %1188 = vmatprep.subr.mxu0 0.0
    %1189 = vmatpush1.msra.mxu0 %v1151
    %1190 = vmatprep.subr.mxu0 0.0
    %1191 = vmatpush1.msra.mxu0 %v1152
    %1192 = vmatprep.subr.mxu0 0.0
    %1193 = vmatpush1.msra.mxu0 0.0
    %1194 = vmatprep.subr.mxu0 0.0
    %1195 = vmatpush1.msra.mxu0 0.0
    %1196 = vmatprep.subr.mxu0 0.0
    %1197 = vmatpush1.msra.mxu0 0.0
    %1198 = vmatprep.subr.mxu0 0.0
    %1199 = vmatpush1.msra.mxu0 0.0
    %1200 = vmatprep.subr.mxu0 0.0
    %1201 = vmatpush1.msra.mxu0 0.0
    %1202 = vmatprep.subr.mxu0 0.0
    %1203 = vmatpush1.msra.mxu0 0.0
    %1204 = vmatprep.subr.mxu0 0.0
    %1205 = vmatpush1.msra.mxu0 0.0
    %1206 = vmatprep.subr.mxu0 0.0
    %1207 = vmatpush1.msra.mxu0 0.0
    %1208 = vmatprep.subr.mxu0 0.0
    %1209 = vmatpush1.msra.mxu0 0.0
    %1210 = vmatprep.subr.mxu0 0.0
    %1211 = vmatpush1.msra.mxu0 0.0
    %1212 = vmatprep.subr.mxu0 0.0
    %1213 = vmatpush1.msra.mxu0 0.0
    %1214 = vmatprep.subr.mxu0 0.0
    %1215 = vmatpush1.msra.mxu0 0.0
    %1216 = vmatprep.subr.mxu0 0.0
    %1217 = vmatpush1.msra.mxu0 0.0
    %1218 = vmatprep.subr.mxu0 0.0
    %1219 = vmatpush1.msra.mxu0 0.0
    %1220 = vmatprep.subr.mxu0 0.0
    %1221 = vmatpush1.msra.mxu0 0.0
    %1222 = vmatprep.subr.mxu0 0.0
    %1223 = vmatpush1.msra.mxu0 0.0
    %1224 = vmatprep.mubr.f32.mxu0 0.0
    %1225 = vmatmul.mubr.f32.gmra.mrb[0].mxu0 %v1136
    %v1226 = vpop.f32.mrb[0].mxu0
    %v1227 = vadd.f32 %v1158, %v1226
    %v1228 = vpop.f32.mrb[0].mxu0
    %1229 = vdwg.mxu0
    %v1230 = vmax.f32 %v1227, 0.0
    %v1231 = vld [vmem:[#allocation7 + $0x60] sm:$0xff]
    %v1232 = vld [vmem:[#allocation7 + $0x118] sm:$0xff]
    %v1233 = vld [vmem:[#allocation7 + $0x1d0] sm:$0xff]
    %v1234 = vld [vmem:[#allocation7 + $0x288] sm:$0xff]
    %v1235 = vld [vmem:[#allocation7 + $0x340] sm:$0xff]
    %v1236 = vld [vmem:[#allocation7 + $0x3f8] sm:$0xff]
    %v1237 = vld [vmem:[#allocation7 + $0x4b0] sm:$0xff]
    %v1238 = vld [vmem:[#allocation7 + $0x568] sm:$0xff]
    %v1239 = vld [vmem:[#allocation7 + $0x620] sm:$0xff]
    %v1240 = vld [vmem:[#allocation7 + $0x6d8] sm:$0xff]
    %v1241 = vld [vmem:[#allocation7 + $0x790] sm:$0xff]
    %v1242 = vld [vmem:[#allocation7 + $0x848] sm:$0xff]
    %v1243 = vld [vmem:[#allocation7 + $0x900] sm:$0xff]
    %v1244 = vld [vmem:[#allocation7 + $0x9b8] sm:$0xff]
    %v1245 = vld [vmem:[#allocation7 + $0xa70] sm:$0xff]
    %v1246 = vld [vmem:[#allocation7 + $0xb28] sm:$0xff]
    %v1247 = vld [vmem:[#allocation8 + $0xc] sm:$0x1]
    %v1249 = vlaneseq
    %v1250 = vshrl.u32 %v1249, 7
    %v1251 = vsub.s32 0, %v1250
    %v1252 = vrot.slane %v1247, %v1251
    %1254 = vmatprep.subr.mxu0 0.0
    %1255 = vmatpush1.msra.mxu0 %v1231
    %1256 = vmatprep.subr.mxu0 0.0
    %1257 = vmatpush1.msra.mxu0 %v1232
    %1258 = vmatprep.subr.mxu0 0.0
    %1259 = vmatpush1.msra.mxu0 %v1233
    %1260 = vmatprep.subr.mxu0 0.0
    %1261 = vmatpush1.msra.mxu0 %v1234
    %1262 = vmatprep.subr.mxu0 0.0
    %1263 = vmatpush1.msra.mxu0 %v1235
    %1264 = vmatprep.subr.mxu0 0.0
    %1265 = vmatpush1.msra.mxu0 %v1236
    %1266 = vmatprep.subr.mxu0 0.0
    %1267 = vmatpush1.msra.mxu0 %v1237
    %1268 = vmatprep.subr.mxu0 0.0
    %1269 = vmatpush1.msra.mxu0 %v1238
    %1270 = vmatprep.subr.mxu0 0.0
    %1271 = vmatpush1.msra.mxu0 %v1239
    %1272 = vmatprep.subr.mxu0 0.0
    %1273 = vmatpush1.msra.mxu0 %v1240
    %1274 = vmatprep.subr.mxu0 0.0
    %1275 = vmatpush1.msra.mxu0 %v1241
    %1276 = vmatprep.subr.mxu0 0.0
    %1277 = vmatpush1.msra.mxu0 %v1242
    %1278 = vmatprep.subr.mxu0 0.0
    %1279 = vmatpush1.msra.mxu0 %v1243
    %1280 = vmatprep.subr.mxu0 0.0
    %1281 = vmatpush1.msra.mxu0 %v1244
    %1282 = vmatprep.subr.mxu0 0.0
    %1283 = vmatpush1.msra.mxu0 %v1245
    %1284 = vmatprep.subr.mxu0 0.0
    %1285 = vmatpush1.msra.mxu0 %v1246
    %1286 = vmatprep.subr.mxu0 0.0
    %1287 = vmatpush1.msra.mxu0 0.0
    %1288 = vmatprep.subr.mxu0 0.0
    %1289 = vmatpush1.msra.mxu0 0.0
    %1290 = vmatprep.subr.mxu0 0.0
    %1291 = vmatpush1.msra.mxu0 0.0
    %1292 = vmatprep.subr.mxu0 0.0
    %1293 = vmatpush1.msra.mxu0 0.0
    %1294 = vmatprep.subr.mxu0 0.0
    %1295 = vmatpush1.msra.mxu0 0.0
    %1296 = vmatprep.subr.mxu0 0.0
    %1297 = vmatpush1.msra.mxu0 0.0
    %1298 = vmatprep.subr.mxu0 0.0
    %1299 = vmatpush1.msra.mxu0 0.0
    %1300 = vmatprep.subr.mxu0 0.0
    %1301 = vmatpush1.msra.mxu0 0.0
    %1302 = vmatprep.subr.mxu0 0.0
    %1303 = vmatpush1.msra.mxu0 0.0
    %1304 = vmatprep.subr.mxu0 0.0
    %1305 = vmatpush1.msra.mxu0 0.0
    %1306 = vmatprep.subr.mxu0 0.0
    %1307 = vmatpush1.msra.mxu0 0.0
    %1308 = vmatprep.subr.mxu0 0.0
    %1309 = vmatpush1.msra.mxu0 0.0
    %1310 = vmatprep.subr.mxu0 0.0
    %1311 = vmatpush1.msra.mxu0 0.0
    %1312 = vmatprep.subr.mxu0 0.0
    %1313 = vmatpush1.msra.mxu0 0.0
    %1314 = vmatprep.subr.mxu0 0.0
    %1315 = vmatpush1.msra.mxu0 0.0
    %1316 = vmatprep.subr.mxu0 0.0
    %1317 = vmatpush1.msra.mxu0 0.0
    %1318 = vmatprep.mubr.f32.mxu0 0.0
    %1319 = vmatmul.mubr.f32.gmra.mrb[0].mxu0 %v1230
    %v1320 = vpop.f32.mrb[0].mxu0
    %v1321 = vadd.f32 %v1252, %v1320
    %v1322 = vpop.f32.mrb[0].mxu0
    %1323 = vdwg.mxu0
    %v1324 = vadd.f32 %v1133, %v1321
    %v1325 = vmax.f32 %v1324, 0.0
    %v1326 = vld [vmem:[#allocation7 + $0x68] sm:$0xff]
    %v1327 = vld [vmem:[#allocation7 + $0x120] sm:$0xff]
    %v1328 = vld [vmem:[#allocation7 + $0x1d8] sm:$0xff]
    %v1329 = vld [vmem:[#allocation7 + $0x290] sm:$0xff]
    %v1330 = vld [vmem:[#allocation7 + $0x348] sm:$0xff]
    %v1331 = vld [vmem:[#allocation7 + $0x400] sm:$0xff]
    %v1332 = vld [vmem:[#allocation7 + $0x4b8] sm:$0xff]
    %v1333 = vld [vmem:[#allocation7 + $0x570] sm:$0xff]
    %v1334 = vld [vmem:[#allocation7 + $0x628] sm:$0xff]
    %v1335 = vld [vmem:[#allocation7 + $0x6e0] sm:$0xff]
    %v1336 = vld [vmem:[#allocation7 + $0x798] sm:$0xff]
    %v1337 = vld [vmem:[#allocation7 + $0x850] sm:$0xff]
    %v1338 = vld [vmem:[#allocation7 + $0x908] sm:$0xff]
    %v1339 = vld [vmem:[#allocation7 + $0x9c0] sm:$0xff]
    %v1340 = vld [vmem:[#allocation7 + $0xa78] sm:$0xff]
    %v1341 = vld [vmem:[#allocation7 + $0xb30] sm:$0xff]
    %v1342 = vld [vmem:[#allocation8 + $0xd] sm:$0x1]
    %v1344 = vlaneseq
    %v1345 = vshrl.u32 %v1344, 7
    %v1346 = vsub.s32 0, %v1345
    %v1347 = vrot.slane %v1342, %v1346
    %1349 = vmatprep.subr.mxu0 0.0
    %1350 = vmatpush1.msra.mxu0 %v1326
    %1351 = vmatprep.subr.mxu0 0.0
    %1352 = vmatpush1.msra.mxu0 %v1327
    %1353 = vmatprep.subr.mxu0 0.0
    %1354 = vmatpush1.msra.mxu0 %v1328
    %1355 = vmatprep.subr.mxu0 0.0
    %1356 = vmatpush1.msra.mxu0 %v1329
    %1357 = vmatprep.subr.mxu0 0.0
    %1358 = vmatpush1.msra.mxu0 %v1330
    %1359 = vmatprep.subr.mxu0 0.0
    %1360 = vmatpush1.msra.mxu0 %v1331
    %1361 = vmatprep.subr.mxu0 0.0
    %1362 = vmatpush1.msra.mxu0 %v1332
    %1363 = vmatprep.subr.mxu0 0.0
    %1364 = vmatpush1.msra.mxu0 %v1333
    %1365 = vmatprep.subr.mxu0 0.0
    %1366 = vmatpush1.msra.mxu0 %v1334
    %1367 = vmatprep.subr.mxu0 0.0
    %1368 = vmatpush1.msra.mxu0 %v1335
    %1369 = vmatprep.subr.mxu0 0.0
    %1370 = vmatpush1.msra.mxu0 %v1336
    %1371 = vmatprep.subr.mxu0 0.0
    %1372 = vmatpush1.msra.mxu0 %v1337
    %1373 = vmatprep.subr.mxu0 0.0
    %1374 = vmatpush1.msra.mxu0 %v1338
    %1375 = vmatprep.subr.mxu0 0.0
    %1376 = vmatpush1.msra.mxu0 %v1339
    %1377 = vmatprep.subr.mxu0 0.0
    %1378 = vmatpush1.msra.mxu0 %v1340
    %1379 = vmatprep.subr.mxu0 0.0
    %1380 = vmatpush1.msra.mxu0 %v1341
    %1381 = vmatprep.subr.mxu0 0.0
    %1382 = vmatpush1.msra.mxu0 0.0
    %1383 = vmatprep.subr.mxu0 0.0
    %1384 = vmatpush1.msra.mxu0 0.0
    %1385 = vmatprep.subr.mxu0 0.0
    %1386 = vmatpush1.msra.mxu0 0.0
    %1387 = vmatprep.subr.mxu0 0.0
    %1388 = vmatpush1.msra.mxu0 0.0
    %1389 = vmatprep.subr.mxu0 0.0
    %1390 = vmatpush1.msra.mxu0 0.0
    %1391 = vmatprep.subr.mxu0 0.0
    %1392 = vmatpush1.msra.mxu0 0.0
    %1393 = vmatprep.subr.mxu0 0.0
    %1394 = vmatpush1.msra.mxu0 0.0
    %1395 = vmatprep.subr.mxu0 0.0
    %1396 = vmatpush1.msra.mxu0 0.0
    %1397 = vmatprep.subr.mxu0 0.0
    %1398 = vmatpush1.msra.mxu0 0.0
    %1399 = vmatprep.subr.mxu0 0.0
    %1400 = vmatpush1.msra.mxu0 0.0
    %1401 = vmatprep.subr.mxu0 0.0
    %1402 = vmatpush1.msra.mxu0 0.0
    %1403 = vmatprep.subr.mxu0 0.0
    %1404 = vmatpush1.msra.mxu0 0.0
    %1405 = vmatprep.subr.mxu0 0.0
    %1406 = vmatpush1.msra.mxu0 0.0
    %1407 = vmatprep.subr.mxu0 0.0
    %1408 = vmatpush1.msra.mxu0 0.0
    %1409 = vmatprep.subr.mxu0 0.0
    %1410 = vmatpush1.msra.mxu0 0.0
    %1411 = vmatprep.subr.mxu0 0.0
    %1412 = vmatpush1.msra.mxu0 0.0
    %1413 = vmatprep.mubr.f32.mxu0 0.0
    %1414 = vmatmul.mubr.f32.gmra.mrb[0].mxu0 %v1325
    %v1415 = vpop.f32.mrb[0].mxu0
    %v1416 = vadd.f32 %v1347, %v1415
    %v1417 = vpop.f32.mrb[0].mxu0
    %1418 = vdwg.mxu0
    %v1419 = vmax.f32 %v1416, 0.0
    %v1420 = vld [vmem:[#allocation7 + $0x70] sm:$0xff]
    %v1421 = vld [vmem:[#allocation7 + $0x128] sm:$0xff]
    %v1422 = vld [vmem:[#allocation7 + $0x1e0] sm:$0xff]
    %v1423 = vld [vmem:[#allocation7 + $0x298] sm:$0xff]
    %v1424 = vld [vmem:[#allocation7 + $0x350] sm:$0xff]
    %v1425 = vld [vmem:[#allocation7 + $0x408] sm:$0xff]
    %v1426 = vld [vmem:[#allocation7 + $0x4c0] sm:$0xff]
    %v1427 = vld [vmem:[#allocation7 + $0x578] sm:$0xff]
    %v1428 = vld [vmem:[#allocation7 + $0x630] sm:$0xff]
    %v1429 = vld [vmem:[#allocation7 + $0x6e8] sm:$0xff]
    %v1430 = vld [vmem:[#allocation7 + $0x7a0] sm:$0xff]
    %v1431 = vld [vmem:[#allocation7 + $0x858] sm:$0xff]
    %v1432 = vld [vmem:[#allocation7 + $0x910] sm:$0xff]
    %v1433 = vld [vmem:[#allocation7 + $0x9c8] sm:$0xff]
    %v1434 = vld [vmem:[#allocation7 + $0xa80] sm:$0xff]
    %v1435 = vld [vmem:[#allocation7 + $0xb38] sm:$0xff]
    %v1436 = vld [vmem:[#allocation8 + $0xe] sm:$0x1]
    %v1438 = vlaneseq
    %v1439 = vshrl.u32 %v1438, 7
    %v1440 = vsub.s32 0, %v1439
    %v1441 = vrot.slane %v1436, %v1440
    %1443 = vmatprep.subr.mxu0 0.0
    %1444 = vmatpush1.msra.mxu0 %v1420
    %1445 = vmatprep.subr.mxu0 0.0
    %1446 = vmatpush1.msra.mxu0 %v1421
    %1447 = vmatprep.subr.mxu0 0.0
    %1448 = vmatpush1.msra.mxu0 %v1422
    %1449 = vmatprep.subr.mxu0 0.0
    %1450 = vmatpush1.msra.mxu0 %v1423
    %1451 = vmatprep.subr.mxu0 0.0
    %1452 = vmatpush1.msra.mxu0 %v1424
    %1453 = vmatprep.subr.mxu0 0.0
    %1454 = vmatpush1.msra.mxu0 %v1425
    %1455 = vmatprep.subr.mxu0 0.0
    %1456 = vmatpush1.msra.mxu0 %v1426
    %1457 = vmatprep.subr.mxu0 0.0
    %1458 = vmatpush1.msra.mxu0 %v1427
    %1459 = vmatprep.subr.mxu0 0.0
    %1460 = vmatpush1.msra.mxu0 %v1428
    %1461 = vmatprep.subr.mxu0 0.0
    %1462 = vmatpush1.msra.mxu0 %v1429
    %1463 = vmatprep.subr.mxu0 0.0
    %1464 = vmatpush1.msra.mxu0 %v1430
    %1465 = vmatprep.subr.mxu0 0.0
    %1466 = vmatpush1.msra.mxu0 %v1431
    %1467 = vmatprep.subr.mxu0 0.0
    %1468 = vmatpush1.msra.mxu0 %v1432
    %1469 = vmatprep.subr.mxu0 0.0
    %1470 = vmatpush1.msra.mxu0 %v1433
    %1471 = vmatprep.subr.mxu0 0.0
    %1472 = vmatpush1.msra.mxu0 %v1434
    %1473 = vmatprep.subr.mxu0 0.0
    %1474 = vmatpush1.msra.mxu0 %v1435
    %1475 = vmatprep.subr.mxu0 0.0
    %1476 = vmatpush1.msra.mxu0 0.0
    %1477 = vmatprep.subr.mxu0 0.0
    %1478 = vmatpush1.msra.mxu0 0.0
    %1479 = vmatprep.subr.mxu0 0.0
    %1480 = vmatpush1.msra.mxu0 0.0
    %1481 = vmatprep.subr.mxu0 0.0
    %1482 = vmatpush1.msra.mxu0 0.0
    %1483 = vmatprep.subr.mxu0 0.0
    %1484 = vmatpush1.msra.mxu0 0.0
    %1485 = vmatprep.subr.mxu0 0.0
    %1486 = vmatpush1.msra.mxu0 0.0
    %1487 = vmatprep.subr.mxu0 0.0
    %1488 = vmatpush1.msra.mxu0 0.0
    %1489 = vmatprep.subr.mxu0 0.0
    %1490 = vmatpush1.msra.mxu0 0.0
    %1491 = vmatprep.subr.mxu0 0.0
    %1492 = vmatpush1.msra.mxu0 0.0
    %1493 = vmatprep.subr.mxu0 0.0
    %1494 = vmatpush1.msra.mxu0 0.0
    %1495 = vmatprep.subr.mxu0 0.0
    %1496 = vmatpush1.msra.mxu0 0.0
    %1497 = vmatprep.subr.mxu0 0.0
    %1498 = vmatpush1.msra.mxu0 0.0
    %1499 = vmatprep.subr.mxu0 0.0
    %1500 = vmatpush1.msra.mxu0 0.0
    %1501 = vmatprep.subr.mxu0 0.0
    %1502 = vmatpush1.msra.mxu0 0.0
    %1503 = vmatprep.subr.mxu0 0.0
    %1504 = vmatpush1.msra.mxu0 0.0
    %1505 = vmatprep.subr.mxu0 0.0
    %1506 = vmatpush1.msra.mxu0 0.0
    %1507 = vmatprep.mubr.f32.mxu0 0.0
    %1508 = vmatmul.mubr.f32.gmra.mrb[0].mxu0 %v1419
    %v1509 = vpop.f32.mrb[0].mxu0
    %v1510 = vadd.f32 %v1441, %v1509
    %v1511 = vpop.f32.mrb[0].mxu0
    %1512 = vdwg.mxu0
    %v1513 = vadd.f32 %v1324, %v1510
    %v1514 = vld [vmem:[#allocation7 + $0x78] sm:$0xff]
    %v1515 = vld [vmem:[#allocation7 + $0x80] sm:$0xff]
    %v1516 = vld [vmem:[#allocation7 + $0x88] sm:$0xff]
    %v1517 = vld [vmem:[#allocation7 + $0x90] sm:$0xff]
    %v1518 = vld [vmem:[#allocation7 + $0x98] sm:$0xff]
    %v1519 = vld [vmem:[#allocation7 + $0x130] sm:$0xff]
    %v1520 = vld [vmem:[#allocation7 + $0x138] sm:$0xff]
    %v1521 = vld [vmem:[#allocation7 + $0x140] sm:$0xff]
    %v1522 = vld [vmem:[#allocation7 + $0x148] sm:$0xff]
    %v1523 = vld [vmem:[#allocation7 + $0x150] sm:$0xff]
    %v1524 = vld [vmem:[#allocation7 + $0x1e8] sm:$0xff]
    %v1525 = vld [vmem:[#allocation7 + $0x1f0] sm:$0xff]
    %v1526 = vld [vmem:[#allocation7 + $0x1f8] sm:$0xff]
    %v1527 = vld [vmem:[#allocation7 + $0x200] sm:$0xff]
    %v1528 = vld [vmem:[#allocation7 + $0x208] sm:$0xff]
    %v1529 = vld [vmem:[#allocation7 + $0x2a0] sm:$0xff]
    %v1530 = vld [vmem:[#allocation7 + $0x2a8] sm:$0xff]
    %v1531 = vld [vmem:[#allocation7 + $0x2b0] sm:$0xff]
    %v1532 = vld [vmem:[#allocation7 + $0x2b8] sm:$0xff]
    %v1533 = vld [vmem:[#allocation7 + $0x2c0] sm:$0xff]
    %v1534 = vld [vmem:[#allocation7 + $0x358] sm:$0xff]
    %v1535 = vld [vmem:[#allocation7 + $0x360] sm:$0xff]
    %v1536 = vld [vmem:[#allocation7 + $0x368] sm:$0xff]
    %v1537 = vld [vmem:[#allocation7 + $0x370] sm:$0xff]
    %v1538 = vld [vmem:[#allocation7 + $0x378] sm:$0xff]
    %v1539 = vld [vmem:[#allocation7 + $0x410] sm:$0xff]
    %v1540 = vld [vmem:[#allocation7 + $0x418] sm:$0xff]
    %v1541 = vld [vmem:[#allocation7 + $0x420] sm:$0xff]
    %v1542 = vld [vmem:[#allocation7 + $0x428] sm:$0xff]
    %v1543 = vld [vmem:[#allocation7 + $0x430] sm:$0xff]
    %v1544 = vld [vmem:[#allocation7 + $0x4c8] sm:$0xff]
    %v1545 = vld [vmem:[#allocation7 + $0x4d0] sm:$0xff]
    %v1546 = vld [vmem:[#allocation7 + $0x4d8] sm:$0xff]
    %v1547 = vld [vmem:[#allocation7 + $0x4e0] sm:$0xff]
    %v1548 = vld [vmem:[#allocation7 + $0x4e8] sm:$0xff]
    %v1549 = vld [vmem:[#allocation7 + $0x580] sm:$0xff]
    %v1550 = vld [vmem:[#allocation7 + $0x588] sm:$0xff]
    %v1551 = vld [vmem:[#allocation7 + $0x590] sm:$0xff]
    %v1552 = vld [vmem:[#allocation7 + $0x598] sm:$0xff]
    %v1553 = vld [vmem:[#allocation7 + $0x5a0] sm:$0xff]
    %v1554 = vld [vmem:[#allocation7 + $0x638] sm:$0xff]
    %v1555 = vld [vmem:[#allocation7 + $0x640] sm:$0xff]
    %v1556 = vld [vmem:[#allocation7 + $0x648] sm:$0xff]
    %v1557 = vld [vmem:[#allocation7 + $0x650] sm:$0xff]
    %v1558 = vld [vmem:[#allocation7 + $0x658] sm:$0xff]
    %v1559 = vld [vmem:[#allocation7 + $0x6f0] sm:$0xff]
    %v1560 = vld [vmem:[#allocation7 + $0x6f8] sm:$0xff]
    %v1561 = vld [vmem:[#allocation7 + $0x700] sm:$0xff]
    %v1562 = vld [vmem:[#allocation7 + $0x708] sm:$0xff]
    %v1563 = vld [vmem:[#allocation7 + $0x710] sm:$0xff]
    %v1564 = vld [vmem:[#allocation7 + $0x7a8] sm:$0xff]
    %v1565 = vld [vmem:[#allocation7 + $0x7b0] sm:$0xff]
    %v1566 = vld [vmem:[#allocation7 + $0x7b8] sm:$0xff]
    %v1567 = vld [vmem:[#allocation7 + $0x7c0] sm:$0xff]
    %v1568 = vld [vmem:[#allocation7 + $0x7c8] sm:$0xff]
    %v1569 = vld [vmem:[#allocation7 + $0x860] sm:$0xff]
    %v1570 = vld [vmem:[#allocation7 + $0x868] sm:$0xff]
    %v1571 = vld [vmem:[#allocation7 + $0x870] sm:$0xff]
    %v1572 = vld [vmem:[#allocation7 + $0x878] sm:$0xff]
    %v1573 = vld [vmem:[#allocation7 + $0x880] sm:$0xff]
    %v1574 = vld [vmem:[#allocation7 + $0x918] sm:$0xff]
    %v1575 = vld [vmem:[#allocation7 + $0x920] sm:$0xff]
    %v1576 = vld [vmem:[#allocation7 + $0x928] sm:$0xff]
    %v1577 = vld [vmem:[#allocation7 + $0x930] sm:$0xff]
    %v1578 = vld [vmem:[#allocation7 + $0x938] sm:$0xff]
    %v1579 = vld [vmem:[#allocation7 + $0x9d0] sm:$0xff]
    %v1580 = vld [vmem:[#allocation7 + $0x9d8] sm:$0xff]
    %v1581 = vld [vmem:[#allocation7 + $0x9e0] sm:$0xff]
    %v1582 = vld [vmem:[#allocation7 + $0x9e8] sm:$0xff]
    %v1583 = vld [vmem:[#allocation7 + $0x9f0] sm:$0xff]
    %v1584 = vld [vmem:[#allocation7 + $0xa88] sm:$0xff]
    %v1585 = vld [vmem:[#allocation7 + $0xa90] sm:$0xff]
    %v1586 = vld [vmem:[#allocation7 + $0xa98] sm:$0xff]
    %v1587 = vld [vmem:[#allocation7 + $0xaa0] sm:$0xff]
    %v1588 = vld [vmem:[#allocation7 + $0xaa8] sm:$0xff]
    %v1589 = vld [vmem:[#allocation7 + $0xb40] sm:$0xff]
    %v1590 = vld [vmem:[#allocation7 + $0xb48] sm:$0xff]
    %v1591 = vld [vmem:[#allocation7 + $0xb50] sm:$0xff]
    %v1592 = vld [vmem:[#allocation7 + $0xb58] sm:$0xff]
    %v1593 = vld [vmem:[#allocation7 + $0xb60] sm:$0xff]
    %v1594 = vld [vmem:[#allocation8 + $0xf] sm:$0x1f]
    %v1596 = vlaneseq
    %v1597 = vshrl.u32 %v1596, 7
    %v1598 = vsub.s32 0, %v1597
    %v1599 = vrot.slane %v1594, %v1598
    %v1600 = vlaneseq
    %v1601 = vshrl.u32 %v1600, 7
    %v1602 = vsub.s32 1, %v1601
    %v1603 = vrot.slane %v1594, %v1602
    %v1604 = vlaneseq
    %v1605 = vshrl.u32 %v1604, 7
    %v1606 = vsub.s32 2, %v1605
    %v1607 = vrot.slane %v1594, %v1606
    %v1608 = vlaneseq
    %v1609 = vshrl.u32 %v1608, 7
    %v1610 = vsub.s32 3, %v1609
    %v1611 = vrot.slane %v1594, %v1610
    %v1612 = vlaneseq
    %v1613 = vshrl.u32 %v1612, 7
    %v1614 = vsub.s32 4, %v1613
    %v1615 = vrot.slane %v1594, %v1614
    %1621 = vmatprep.subr.mxu0 %v1515
    %1622 = vmatpush1.msra.mxu0 %v1514
    %1623 = vmatprep.subr.mxu0 %v1520
    %1624 = vmatpush1.msra.mxu0 %v1519
    %1625 = vmatprep.subr.mxu0 %v1525
    %1626 = vmatpush1.msra.mxu0 %v1524
    %1627 = vmatprep.subr.mxu0 %v1530
    %1628 = vmatpush1.msra.mxu0 %v1529
    %1629 = vmatprep.subr.mxu0 %v1535
    %1630 = vmatpush1.msra.mxu0 %v1534
    %1631 = vmatprep.subr.mxu0 %v1540
    %1632 = vmatpush1.msra.mxu0 %v1539
    %1633 = vmatprep.subr.mxu0 %v1545
    %1634 = vmatpush1.msra.mxu0 %v1544
    %1635 = vmatprep.subr.mxu0 %v1550
    %1636 = vmatpush1.msra.mxu0 %v1549
    %1637 = vmatprep.subr.mxu0 %v1555
    %1638 = vmatpush1.msra.mxu0 %v1554
    %1639 = vmatprep.subr.mxu0 %v1560
    %1640 = vmatpush1.msra.mxu0 %v1559
    %1641 = vmatprep.subr.mxu0 %v1565
    %1642 = vmatpush1.msra.mxu0 %v1564
    %1643 = vmatprep.subr.mxu0 %v1570
    %1644 = vmatpush1.msra.mxu0 %v1569
    %1645 = vmatprep.subr.mxu0 %v1575
    %1646 = vmatpush1.msra.mxu0 %v1574
    %1647 = vmatprep.subr.mxu0 %v1580
    %1648 = vmatpush1.msra.mxu0 %v1579
    %1649 = vmatprep.subr.mxu0 %v1585
    %1650 = vmatpush1.msra.mxu0 %v1584
    %1651 = vmatprep.subr.mxu0 %v1590
    %1652 = vmatpush1.msra.mxu0 %v1589
    %1653 = vmatprep.subr.mxu0 0.0
    %1654 = vmatpush1.msra.mxu0 0.0
    %1655 = vmatprep.subr.mxu0 0.0
    %1656 = vmatpush1.msra.mxu0 0.0
    %1657 = vmatprep.subr.mxu0 0.0
    %1658 = vmatpush1.msra.mxu0 0.0
    %1659 = vmatprep.subr.mxu0 0.0
    %1660 = vmatpush1.msra.mxu0 0.0
    %1661 = vmatprep.subr.mxu0 0.0
    %1662 = vmatpush1.msra.mxu0 0.0
    %1663 = vmatprep.subr.mxu0 0.0
    %1664 = vmatpush1.msra.mxu0 0.0
    %1665 = vmatprep.subr.mxu0 0.0
    %1666 = vmatpush1.msra.mxu0 0.0
    %1667 = vmatprep.subr.mxu0 0.0
    %1668 = vmatpush1.msra.mxu0 0.0
    %1669 = vmatprep.subr.mxu0 0.0
    %1670 = vmatpush1.msra.mxu0 0.0
    %1671 = vmatprep.subr.mxu0 0.0
    %1672 = vmatpush1.msra.mxu0 0.0
    %1673 = vmatprep.subr.mxu0 0.0
    %1674 = vmatpush1.msra.mxu0 0.0
    %1675 = vmatprep.subr.mxu0 0.0
    %1676 = vmatpush1.msra.mxu0 0.0
    %1677 = vmatprep.subr.mxu0 0.0
    %1678 = vmatpush1.msra.mxu0 0.0
    %1679 = vmatprep.subr.mxu0 0.0
    %1680 = vmatpush1.msra.mxu0 0.0
    %1681 = vmatprep.subr.mxu0 0.0
    %1682 = vmatpush1.msra.mxu0 0.0
    %1683 = vmatprep.subr.mxu0 0.0
    %1684 = vmatpush1.msra.mxu0 0.0
    %1685 = vmatprep.mubr.f32.mxu0 0.0
    %1686 = vmatmul.mubr.f32.gmra.mrb[0].mxu0 %v1513
    %v1687 = vpop.f32.mrb[0].mxu0
    %v1688 = vadd.f32 %v1599, %v1687
    %v1689 = vpop.f32.mrb[0].mxu0
    %v1690 = vadd.f32 %v1603, %v1689
    %1691 = vdwg.mxu0
    %1692 = vmatprep.subr.mxu0 %v1517
    %1693 = vmatpush1.msra.mxu0 %v1516
    %1694 = vmatprep.subr.mxu0 %v1522
    %1695 = vmatpush1.msra.mxu0 %v1521
    %1696 = vmatprep.subr.mxu0 %v1527
    %1697 = vmatpush1.msra.mxu0 %v1526
    %1698 = vmatprep.subr.mxu0 %v1532
    %1699 = vmatpush1.msra.mxu0 %v1531
    %1700 = vmatprep.subr.mxu0 %v1537
    %1701 = vmatpush1.msra.mxu0 %v1536
    %1702 = vmatprep.subr.mxu0 %v1542
    %1703 = vmatpush1.msra.mxu0 %v1541
    %1704 = vmatprep.subr.mxu0 %v1547
    %1705 = vmatpush1.msra.mxu0 %v1546
    %1706 = vmatprep.subr.mxu0 %v1552
    %1707 = vmatpush1.msra.mxu0 %v1551
    %1708 = vmatprep.subr.mxu0 %v1557
    %1709 = vmatpush1.msra.mxu0 %v1556
    %1710 = vmatprep.subr.mxu0 %v1562
    %1711 = vmatpush1.msra.mxu0 %v1561
    %1712 = vmatprep.subr.mxu0 %v1567
    %1713 = vmatpush1.msra.mxu0 %v1566
    %1714 = vmatprep.subr.mxu0 %v1572
    %1715 = vmatpush1.msra.mxu0 %v1571
    %1716 = vmatprep.subr.mxu0 %v1577
    %1717 = vmatpush1.msra.mxu0 %v1576
    %1718 = vmatprep.subr.mxu0 %v1582
    %1719 = vmatpush1.msra.mxu0 %v1581
    %1720 = vmatprep.subr.mxu0 %v1587
    %1721 = vmatpush1.msra.mxu0 %v1586
    %1722 = vmatprep.subr.mxu0 %v1592
    %1723 = vmatpush1.msra.mxu0 %v1591
    %1724 = vmatprep.subr.mxu0 0.0
    %1725 = vmatpush1.msra.mxu0 0.0
    %1726 = vmatprep.subr.mxu0 0.0
    %1727 = vmatpush1.msra.mxu0 0.0
    %1728 = vmatprep.subr.mxu0 0.0
    %1729 = vmatpush1.msra.mxu0 0.0
    %1730 = vmatprep.subr.mxu0 0.0
    %1731 = vmatpush1.msra.mxu0 0.0
    %1732 = vmatprep.subr.mxu0 0.0
    %1733 = vmatpush1.msra.mxu0 0.0
    %1734 = vmatprep.subr.mxu0 0.0
    %1735 = vmatpush1.msra.mxu0 0.0
    %1736 = vmatprep.subr.mxu0 0.0
    %1737 = vmatpush1.msra.mxu0 0.0
    %1738 = vmatprep.subr.mxu0 0.0
    %1739 = vmatpush1.msra.mxu0 0.0
    %1740 = vmatprep.subr.mxu0 0.0
    %1741 = vmatpush1.msra.mxu0 0.0
    %1742 = vmatprep.subr.mxu0 0.0
    %1743 = vmatpush1.msra.mxu0 0.0
    %1744 = vmatprep.subr.mxu0 0.0
    %1745 = vmatpush1.msra.mxu0 0.0
    %1746 = vmatprep.subr.mxu0 0.0
    %1747 = vmatpush1.msra.mxu0 0.0
    %1748 = vmatprep.subr.mxu0 0.0
    %1749 = vmatpush1.msra.mxu0 0.0
    %1750 = vmatprep.subr.mxu0 0.0
    %1751 = vmatpush1.msra.mxu0 0.0
    %1752 = vmatprep.subr.mxu0 0.0
    %1753 = vmatpush1.msra.mxu0 0.0
    %1754 = vmatprep.subr.mxu0 0.0
    %1755 = vmatpush1.msra.mxu0 0.0
    %1756 = vmatprep.mubr.f32.mxu0 0.0
    %1757 = vmatmul.mubr.f32.gmra.mrb[0].mxu0 %v1513
    %v1758 = vpop.f32.mrb[0].mxu0
    %v1759 = vadd.f32 %v1607, %v1758
    %v1760 = vpop.f32.mrb[0].mxu0
    %v1761 = vadd.f32 %v1611, %v1760
    %1762 = vdwg.mxu0
    %1763 = vmatprep.subr.mxu0 0.0
    %1764 = vmatpush1.msra.mxu0 %v1518
    %1765 = vmatprep.subr.mxu0 0.0
    %1766 = vmatpush1.msra.mxu0 %v1523
    %1767 = vmatprep.subr.mxu0 0.0
    %1768 = vmatpush1.msra.mxu0 %v1528
    %1769 = vmatprep.subr.mxu0 0.0
    %1770 = vmatpush1.msra.mxu0 %v1533
    %1771 = vmatprep.subr.mxu0 0.0
    %1772 = vmatpush1.msra.mxu0 %v1538
    %1773 = vmatprep.subr.mxu0 0.0
    %1774 = vmatpush1.msra.mxu0 %v1543
    %1775 = vmatprep.subr.mxu0 0.0
    %1776 = vmatpush1.msra.mxu0 %v1548
    %1777 = vmatprep.subr.mxu0 0.0
    %1778 = vmatpush1.msra.mxu0 %v1553
    %1779 = vmatprep.subr.mxu0 0.0
    %1780 = vmatpush1.msra.mxu0 %v1558
    %1781 = vmatprep.subr.mxu0 0.0
    %1782 = vmatpush1.msra.mxu0 %v1563
    %1783 = vmatprep.subr.mxu0 0.0
    %1784 = vmatpush1.msra.mxu0 %v1568
    %1785 = vmatprep.subr.mxu0 0.0
    %1786 = vmatpush1.msra.mxu0 %v1573
    %1787 = vmatprep.subr.mxu0 0.0
    %1788 = vmatpush1.msra.mxu0 %v1578
    %1789 = vmatprep.subr.mxu0 0.0
    %1790 = vmatpush1.msra.mxu0 %v1583
    %1791 = vmatprep.subr.mxu0 0.0
    %1792 = vmatpush1.msra.mxu0 %v1588
    %1793 = vmatprep.subr.mxu0 0.0
    %1794 = vmatpush1.msra.mxu0 %v1593
    %1795 = vmatprep.subr.mxu0 0.0
    %1796 = vmatpush1.msra.mxu0 0.0
    %1797 = vmatprep.subr.mxu0 0.0
    %1798 = vmatpush1.msra.mxu0 0.0
    %1799 = vmatprep.subr.mxu0 0.0
    %1800 = vmatpush1.msra.mxu0 0.0
    %1801 = vmatprep.subr.mxu0 0.0
    %1802 = vmatpush1.msra.mxu0 0.0
    %1803 = vmatprep.subr.mxu0 0.0
    %1804 = vmatpush1.msra.mxu0 0.0
    %1805 = vmatprep.subr.mxu0 0.0
    %1806 = vmatpush1.msra.mxu0 0.0
    %1807 = vmatprep.subr.mxu0 0.0
    %1808 = vmatpush1.msra.mxu0 0.0
    %1809 = vmatprep.subr.mxu0 0.0
    %1810 = vmatpush1.msra.mxu0 0.0
    %1811 = vmatprep.subr.mxu0 0.0
    %1812 = vmatpush1.msra.mxu0 0.0
    %1813 = vmatprep.subr.mxu0 0.0
    %1814 = vmatpush1.msra.mxu0 0.0
    %1815 = vmatprep.subr.mxu0 0.0
    %1816 = vmatpush1.msra.mxu0 0.0
    %1817 = vmatprep.subr.mxu0 0.0
    %1818 = vmatpush1.msra.mxu0 0.0
    %1819 = vmatprep.subr.mxu0 0.0
    %1820 = vmatpush1.msra.mxu0 0.0
    %1821 = vmatprep.subr.mxu0 0.0
    %1822 = vmatpush1.msra.mxu0 0.0
    %1823 = vmatprep.subr.mxu0 0.0
    %1824 = vmatpush1.msra.mxu0 0.0
    %1825 = vmatprep.subr.mxu0 0.0
    %1826 = vmatpush1.msra.mxu0 0.0
    %1827 = vmatprep.mubr.f32.mxu0 0.0
    %1828 = vmatmul.mubr.f32.gmra.mrb[0].mxu0 %v1513
    %v1829 = vpop.f32.mrb[0].mxu0
    %v1830 = vadd.f32 %v1615, %v1829
    %v1831 = vpop.f32.mrb[0].mxu0
    %1832 = vdwg.mxu0
    %v1833 = vld [vmem:[#allocation5] sm:$0x3]
    %v1834 = vld [vmem:[#allocation7 + $0xa0] sm:$0xff]
    %v1835 = vld [vmem:[#allocation7 + $0xa8] sm:$0xff]
    %v1836 = vld [vmem:[#allocation7 + $0x158] sm:$0xff]
    %v1837 = vld [vmem:[#allocation7 + $0x160] sm:$0xff]
    %v1838 = vld [vmem:[#allocation7 + $0x210] sm:$0xff]
    %v1839 = vld [vmem:[#allocation7 + $0x218] sm:$0xff]
    %v1840 = vld [vmem:[#allocation7 + $0x2c8] sm:$0xff]
    %v1841 = vld [vmem:[#allocation7 + $0x2d0] sm:$0xff]
    %v1842 = vld [vmem:[#allocation7 + $0x380] sm:$0xff]
    %v1843 = vld [vmem:[#allocation7 + $0x388] sm:$0xff]
    %v1844 = vld [vmem:[#allocation7 + $0x438] sm:$0xff]
    %v1845 = vld [vmem:[#allocation7 + $0x440] sm:$0xff]
    %v1846 = vld [vmem:[#allocation7 + $0x4f0] sm:$0xff]
    %v1847 = vld [vmem:[#allocation7 + $0x4f8] sm:$0xff]
    %v1848 = vld [vmem:[#allocation7 + $0x5a8] sm:$0xff]
    %v1849 = vld [vmem:[#allocation7 + $0x5b0] sm:$0xff]
    %v1850 = vld [vmem:[#allocation7 + $0x660] sm:$0xff]
    %v1851 = vld [vmem:[#allocation7 + $0x668] sm:$0xff]
    %v1852 = vld [vmem:[#allocation7 + $0x718] sm:$0xff]
    %v1853 = vld [vmem:[#allocation7 + $0x720] sm:$0xff]
    %v1854 = vld [vmem:[#allocation7 + $0x7d0] sm:$0xff]
    %v1855 = vld [vmem:[#allocation7 + $0x7d8] sm:$0xff]
    %v1856 = vld [vmem:[#allocation7 + $0x888] sm:$0xff]
    %v1857 = vld [vmem:[#allocation7 + $0x890] sm:$0xff]
    %v1858 = vld [vmem:[#allocation7 + $0x940] sm:$0xff]
    %v1859 = vld [vmem:[#allocation7 + $0x948] sm:$0xff]
    %v1860 = vld [vmem:[#allocation7 + $0x9f8] sm:$0xff]
    %v1861 = vld [vmem:[#allocation7 + $0xa00] sm:$0xff]
    %v1862 = vld [vmem:[#allocation7 + $0xab0] sm:$0xff]
    %v1863 = vld [vmem:[#allocation7 + $0xab8] sm:$0xff]
    %v1864 = vld [vmem:[#allocation7 + $0xb68] sm:$0xff]
    %v1865 = vld [vmem:[#allocation7 + $0xb70] sm:$0xff]
    %1866 = vmatprep.subr.mxu0 %v1835
    %1867 = vmatpush1.msra.mxu0 %v1834
    %1868 = vmatprep.subr.mxu0 %v1837
    %1869 = vmatpush1.msra.mxu0 %v1836
    %1870 = vmatprep.subr.mxu0 %v1839
    %1871 = vmatpush1.msra.mxu0 %v1838
    %1872 = vmatprep.subr.mxu0 %v1841
    %1873 = vmatpush1.msra.mxu0 %v1840
    %1874 = vmatprep.subr.mxu0 %v1843
    %1875 = vmatpush1.msra.mxu0 %v1842
    %1876 = vmatprep.subr.mxu0 %v1845
    %1877 = vmatpush1.msra.mxu0 %v1844
    %1878 = vmatprep.subr.mxu0 %v1847
    %1879 = vmatpush1.msra.mxu0 %v1846
    %1880 = vmatprep.subr.mxu0 %v1849
    %1881 = vmatpush1.msra.mxu0 %v1848
    %1882 = vmatprep.subr.mxu0 %v1851
    %1883 = vmatpush1.msra.mxu0 %v1850
    %1884 = vmatprep.subr.mxu0 %v1853
    %1885 = vmatpush1.msra.mxu0 %v1852
    %1886 = vmatprep.subr.mxu0 %v1855
    %1887 = vmatpush1.msra.mxu0 %v1854
    %1888 = vmatprep.subr.mxu0 %v1857
    %1889 = vmatpush1.msra.mxu0 %v1856
    %1890 = vmatprep.subr.mxu0 %v1859
    %1891 = vmatpush1.msra.mxu0 %v1858
    %1892 = vmatprep.subr.mxu0 %v1861
    %1893 = vmatpush1.msra.mxu0 %v1860
    %1894 = vmatprep.subr.mxu0 %v1863
    %1895 = vmatpush1.msra.mxu0 %v1862
    %1896 = vmatprep.subr.mxu0 %v1865
    %1897 = vmatpush1.msra.mxu0 %v1864
    %1898 = vmatprep.subr.mxu0 0.0
    %1899 = vmatpush1.msra.mxu0 0.0
    %1900 = vmatprep.subr.mxu0 0.0
    %1901 = vmatpush1.msra.mxu0 0.0
    %1902 = vmatprep.subr.mxu0 0.0
    %1903 = vmatpush1.msra.mxu0 0.0
    %1904 = vmatprep.subr.mxu0 0.0
    %1905 = vmatpush1.msra.mxu0 0.0
    %1906 = vmatprep.subr.mxu0 0.0
    %1907 = vmatpush1.msra.mxu0 0.0
    %1908 = vmatprep.subr.mxu0 0.0
    %1909 = vmatpush1.msra.mxu0 0.0
    %1910 = vmatprep.subr.mxu0 0.0
    %1911 = vmatpush1.msra.mxu0 0.0
    %1912 = vmatprep.subr.mxu0 0.0
    %1913 = vmatpush1.msra.mxu0 0.0
    %1914 = vmatprep.subr.mxu0 0.0
    %1915 = vmatpush1.msra.mxu0 0.0
    %1916 = vmatprep.subr.mxu0 0.0
    %1917 = vmatpush1.msra.mxu0 0.0
    %1918 = vmatprep.subr.mxu0 0.0
    %1919 = vmatpush1.msra.mxu0 0.0
    %1920 = vmatprep.subr.mxu0 0.0
    %1921 = vmatpush1.msra.mxu0 0.0
    %1922 = vmatprep.subr.mxu0 0.0
    %1923 = vmatpush1.msra.mxu0 0.0
    %1924 = vmatprep.subr.mxu0 0.0
    %1925 = vmatpush1.msra.mxu0 0.0
    %1926 = vmatprep.subr.mxu0 0.0
    %1927 = vmatpush1.msra.mxu0 0.0
    %1928 = vmatprep.subr.mxu0 0.0
    %1929 = vmatpush1.msra.mxu0 0.0
    %1930 = vmatprep.mubr.f32.mxu0 0.0
    %1931 = vmatmul.mubr.f32.gmra.mrb[0].mxu0 %v1833
    %v1932 = vpop.f32.mrb[0].mxu0
    %v1933 = vadd.f32 0.0, %v1932
    %v1934 = vpop.f32.mrb[0].mxu0
    %v1935 = vadd.f32 0.0, %v1934
    %1936 = vdwg.mxu0
    %v1937 = vmul.f32 %v1688, %v1933
    %v1938 = vmul.f32 %v1690, %v1935
    %v1939 = vld [vmem:[#allocation10] sm:$0xff]
    %v1940 = vld [vmem:[#allocation10 + $0x8] sm:$0xff]
    %v1941 = vld [vmem:[#allocation10 + $0x10] sm:$0xff]
    %v1942 = vld [vmem:[#allocation10 + $0x18] sm:$0xff]
    %v1943 = vld [vmem:[#allocation10 + $0x20] sm:$0xff]
    %v1944 = vld [vmem:[#allocation10 + $0x28] sm:$0xff]
    %v1945 = vld [vmem:[#allocation10 + $0x30] sm:$0xff]
    %v1946 = vld [vmem:[#allocation10 + $0x38] sm:$0xff]
    %v1947 = vld [vmem:[#allocation10 + $0x40] sm:$0xff]
    %v1948 = vld [vmem:[#allocation10 + $0x48] sm:$0xff]
    %v1949 = vld [vmem:[#allocation10 + $0x50] sm:$0xff]
    %v1950 = vld [vmem:[#allocation10 + $0x58] sm:$0xff]
    %v1951 = vld [vmem:[#allocation10 + $0x60] sm:$0xff]
    %v1952 = vld [vmem:[#allocation10 + $0x68] sm:$0xff]
    %v1953 = vld [vmem:[#allocation10 + $0x70] sm:$0xff]
    %v1954 = vld [vmem:[#allocation10 + $0x78] sm:$0xff]
    %v1955 = vld [vmem:[#allocation10 + $0x80] sm:$0xff]
    %v1956 = vld [vmem:[#allocation10 + $0x88] sm:$0xff]
    %v1957 = vld [vmem:[#allocation10 + $0x90] sm:$0xff]
    %v1958 = vld [vmem:[#allocation10 + $0x98] sm:$0xff]
    %v1959 = vld [vmem:[#allocation10 + $0xa0] sm:$0xff]
    %v1960 = vld [vmem:[#allocation10 + $0xa8] sm:$0xff]
    %v1961 = vld [vmem:[#allocation10 + $0xb0] sm:$0xff]
    %v1962 = vld [vmem:[#allocation10 + $0xb8] sm:$0xff]
    %v1963 = vld [vmem:[#allocation10 + $0xc0] sm:$0xff]
    %v1964 = vld [vmem:[#allocation10 + $0xc8] sm:$0xff]
    %v1965 = vld [vmem:[#allocation10 + $0xd0] sm:$0xff]
    %v1966 = vld [vmem:[#allocation10 + $0xd8] sm:$0xff]
    %v1967 = vld [vmem:[#allocation10 + $0xe0] sm:$0xff]
    %v1968 = vld [vmem:[#allocation10 + $0xe8] sm:$0xff]
    %v1969 = vld [vmem:[#allocation10 + $0xf0] sm:$0xff]
    %v1970 = vld [vmem:[#allocation10 + $0xf8] sm:$0xff]
    %1971 = vmatprep.subr.mxu0 0.0
    %1972 = vmatpush1.msra.mxu0 %v1939
    %1973 = vmatprep.subr.mxu0 0.0
    %1974 = vmatpush1.msra.mxu0 %v1940
    %1975 = vmatprep.subr.mxu0 0.0
    %1976 = vmatpush1.msra.mxu0 %v1941
    %1977 = vmatprep.subr.mxu0 0.0
    %1978 = vmatpush1.msra.mxu0 %v1942
    %1979 = vmatprep.subr.mxu0 0.0
    %1980 = vmatpush1.msra.mxu0 %v1943
    %1981 = vmatprep.subr.mxu0 0.0
    %1982 = vmatpush1.msra.mxu0 %v1944
    %1983 = vmatprep.subr.mxu0 0.0
    %1984 = vmatpush1.msra.mxu0 %v1945
    %1985 = vmatprep.subr.mxu0 0.0
    %1986 = vmatpush1.msra.mxu0 %v1946
    %1987 = vmatprep.subr.mxu0 0.0
    %1988 = vmatpush1.msra.mxu0 %v1947
    %1989 = vmatprep.subr.mxu0 0.0
    %1990 = vmatpush1.msra.mxu0 %v1948
    %1991 = vmatprep.subr.mxu0 0.0
    %1992 = vmatpush1.msra.mxu0 %v1949
    %1993 = vmatprep.subr.mxu0 0.0
    %1994 = vmatpush1.msra.mxu0 %v1950
    %1995 = vmatprep.subr.mxu0 0.0
    %1996 = vmatpush1.msra.mxu0 %v1951
    %1997 = vmatprep.subr.mxu0 0.0
    %1998 = vmatpush1.msra.mxu0 %v1952
    %1999 = vmatprep.subr.mxu0 0.0
    %2000 = vmatpush1.msra.mxu0 %v1953
    %2001 = vmatprep.subr.mxu0 0.0
    %2002 = vmatpush1.msra.mxu0 %v1954
    %2003 = vmatprep.subr.mxu0 0.0
    %2004 = vmatpush1.msra.mxu0 %v1955
    %2005 = vmatprep.subr.mxu0 0.0
    %2006 = vmatpush1.msra.mxu0 %v1956
    %2007 = vmatprep.subr.mxu0 0.0
    %2008 = vmatpush1.msra.mxu0 %v1957
    %2009 = vmatprep.subr.mxu0 0.0
    %2010 = vmatpush1.msra.mxu0 %v1958
    %2011 = vmatprep.subr.mxu0 0.0
    %2012 = vmatpush1.msra.mxu0 %v1959
    %2013 = vmatprep.subr.mxu0 0.0
    %2014 = vmatpush1.msra.mxu0 %v1960
    %2015 = vmatprep.subr.mxu0 0.0
    %2016 = vmatpush1.msra.mxu0 %v1961
    %2017 = vmatprep.subr.mxu0 0.0
    %2018 = vmatpush1.msra.mxu0 %v1962
    %2019 = vmatprep.subr.mxu0 0.0
    %2020 = vmatpush1.msra.mxu0 %v1963
    %2021 = vmatprep.subr.mxu0 0.0
    %2022 = vmatpush1.msra.mxu0 %v1964
    %2023 = vmatprep.subr.mxu0 0.0
    %2024 = vmatpush1.msra.mxu0 %v1965
    %2025 = vmatprep.subr.mxu0 0.0
    %2026 = vmatpush1.msra.mxu0 %v1966
    %2027 = vmatprep.subr.mxu0 0.0
    %2028 = vmatpush1.msra.mxu0 %v1967
    %2029 = vmatprep.subr.mxu0 0.0
    %2030 = vmatpush1.msra.mxu0 %v1968
    %2031 = vmatprep.subr.mxu0 0.0
    %2032 = vmatpush1.msra.mxu0 %v1969
    %2033 = vmatprep.subr.mxu0 0.0
    %2034 = vmatpush1.msra.mxu0 %v1970
    %2035 = vmatprep.mubr.f32.mxu0 %v1938
    %2036 = vmatmul.mubr.f32.gmra.mrb[0].mxu0 %v1937
    %v2037 = vpop.f32.mrb[0].mxu0
    %v2038 = vadd.f32 %v1759, %v2037
    %v2039 = vpop.f32.mrb[0].mxu0
    %2040 = vdwg.mxu0
    %v2041 = vmax.f32 %v2038, 0.0
    %v2042 = vld [vmem:[#allocation7 + $0xb0] sm:$0xff]
    %v2043 = vld [vmem:[#allocation7 + $0x168] sm:$0xff]
    %v2044 = vld [vmem:[#allocation7 + $0x220] sm:$0xff]
    %v2045 = vld [vmem:[#allocation7 + $0x2d8] sm:$0xff]
    %v2046 = vld [vmem:[#allocation7 + $0x390] sm:$0xff]
    %v2047 = vld [vmem:[#allocation7 + $0x448] sm:$0xff]
    %v2048 = vld [vmem:[#allocation7 + $0x500] sm:$0xff]
    %v2049 = vld [vmem:[#allocation7 + $0x5b8] sm:$0xff]
    %v2050 = vld [vmem:[#allocation7 + $0x670] sm:$0xff]
    %v2051 = vld [vmem:[#allocation7 + $0x728] sm:$0xff]
    %v2052 = vld [vmem:[#allocation7 + $0x7e0] sm:$0xff]
    %v2053 = vld [vmem:[#allocation7 + $0x898] sm:$0xff]
    %v2054 = vld [vmem:[#allocation7 + $0x950] sm:$0xff]
    %v2055 = vld [vmem:[#allocation7 + $0xa08] sm:$0xff]
    %v2056 = vld [vmem:[#allocation7 + $0xac0] sm:$0xff]
    %v2057 = vld [vmem:[#allocation7 + $0xb78] sm:$0xff]
    %2058 = vmatprep.subr.mxu0 0.0
    %2059 = vmatpush1.msra.mxu0 %v2042
    %2060 = vmatprep.subr.mxu0 0.0
    %2061 = vmatpush1.msra.mxu0 %v2043
    %2062 = vmatprep.subr.mxu0 0.0
    %2063 = vmatpush1.msra.mxu0 %v2044
    %2064 = vmatprep.subr.mxu0 0.0
    %2065 = vmatpush1.msra.mxu0 %v2045
    %2066 = vmatprep.subr.mxu0 0.0
    %2067 = vmatpush1.msra.mxu0 %v2046
    %2068 = vmatprep.subr.mxu0 0.0
    %2069 = vmatpush1.msra.mxu0 %v2047
    %2070 = vmatprep.subr.mxu0 0.0
    %2071 = vmatpush1.msra.mxu0 %v2048
    %2072 = vmatprep.subr.mxu0 0.0
    %2073 = vmatpush1.msra.mxu0 %v2049
    %2074 = vmatprep.subr.mxu0 0.0
    %2075 = vmatpush1.msra.mxu0 %v2050
    %2076 = vmatprep.subr.mxu0 0.0
    %2077 = vmatpush1.msra.mxu0 %v2051
    %2078 = vmatprep.subr.mxu0 0.0
    %2079 = vmatpush1.msra.mxu0 %v2052
    %2080 = vmatprep.subr.mxu0 0.0
    %2081 = vmatpush1.msra.mxu0 %v2053
    %2082 = vmatprep.subr.mxu0 0.0
    %2083 = vmatpush1.msra.mxu0 %v2054
    %2084 = vmatprep.subr.mxu0 0.0
    %2085 = vmatpush1.msra.mxu0 %v2055
    %2086 = vmatprep.subr.mxu0 0.0
    %2087 = vmatpush1.msra.mxu0 %v2056
    %2088 = vmatprep.subr.mxu0 0.0
    %2089 = vmatpush1.msra.mxu0 %v2057
    %2090 = vmatprep.subr.mxu0 0.0
    %2091 = vmatpush1.msra.mxu0 0.0
    %2092 = vmatprep.subr.mxu0 0.0
    %2093 = vmatpush1.msra.mxu0 0.0
    %2094 = vmatprep.subr.mxu0 0.0
    %2095 = vmatpush1.msra.mxu0 0.0
    %2096 = vmatprep.subr.mxu0 0.0
    %2097 = vmatpush1.msra.mxu0 0.0
    %2098 = vmatprep.subr.mxu0 0.0
    %2099 = vmatpush1.msra.mxu0 0.0
    %2100 = vmatprep.subr.mxu0 0.0
    %2101 = vmatpush1.msra.mxu0 0.0
    %2102 = vmatprep.subr.mxu0 0.0
    %2103 = vmatpush1.msra.mxu0 0.0
    %2104 = vmatprep.subr.mxu0 0.0
    %2105 = vmatpush1.msra.mxu0 0.0
    %2106 = vmatprep.subr.mxu0 0.0
    %2107 = vmatpush1.msra.mxu0 0.0
    %2108 = vmatprep.subr.mxu0 0.0
    %2109 = vmatpush1.msra.mxu0 0.0
    %2110 = vmatprep.subr.mxu0 0.0
    %2111 = vmatpush1.msra.mxu0 0.0
    %2112 = vmatprep.subr.mxu0 0.0
    %2113 = vmatpush1.msra.mxu0 0.0
    %2114 = vmatprep.subr.mxu0 0.0
    %2115 = vmatpush1.msra.mxu0 0.0
    %2116 = vmatprep.subr.mxu0 0.0
    %2117 = vmatpush1.msra.mxu0 0.0
    %2118 = vmatprep.subr.mxu0 0.0
    %2119 = vmatpush1.msra.mxu0 0.0
    %2120 = vmatprep.subr.mxu0 0.0
    %2121 = vmatpush1.msra.mxu0 0.0
    %2122 = vmatprep.mubr.f32.mxu0 0.0
    %2123 = vmatmul.mubr.f32.gmra.mrb[0].mxu0 %v2041
    %v2124 = vpop.f32.mrb[0].mxu0
    %v2125 = vadd.f32 0.0, %v2124
    %v2126 = vpop.f32.mrb[0].mxu0
    %2127 = vdwg.mxu0
    %v2128 = vmul.f32 %v1761, %v2125
    %v2129 = vld [vmem:[#allocation11] sm:$0xff]
    %v2130 = vld [vmem:[#allocation11 + $0x8] sm:$0xff]
    %v2131 = vld [vmem:[#allocation11 + $0x10] sm:$0xff]
    %v2132 = vld [vmem:[#allocation11 + $0x18] sm:$0xff]
    %v2133 = vld [vmem:[#allocation11 + $0x20] sm:$0xff]
    %v2134 = vld [vmem:[#allocation11 + $0x28] sm:$0xff]
    %v2135 = vld [vmem:[#allocation11 + $0x30] sm:$0xff]
    %v2136 = vld [vmem:[#allocation11 + $0x38] sm:$0xff]
    %v2137 = vld [vmem:[#allocation11 + $0x40] sm:$0xff]
    %v2138 = vld [vmem:[#allocation11 + $0x48] sm:$0xff]
    %v2139 = vld [vmem:[#allocation11 + $0x50] sm:$0xff]
    %v2140 = vld [vmem:[#allocation11 + $0x58] sm:$0xff]
    %v2141 = vld [vmem:[#allocation11 + $0x60] sm:$0xff]
    %v2142 = vld [vmem:[#allocation11 + $0x68] sm:$0xff]
    %v2143 = vld [vmem:[#allocation11 + $0x70] sm:$0xff]
    %v2144 = vld [vmem:[#allocation11 + $0x78] sm:$0xff]
    %2145 = vmatprep.subr.mxu0 0.0
    %2146 = vmatpush1.msra.mxu0 %v2129
    %2147 = vmatprep.subr.mxu0 0.0
    %2148 = vmatpush1.msra.mxu0 %v2130
    %2149 = vmatprep.subr.mxu0 0.0
    %2150 = vmatpush1.msra.mxu0 %v2131
    %2151 = vmatprep.subr.mxu0 0.0
    %2152 = vmatpush1.msra.mxu0 %v2132
    %2153 = vmatprep.subr.mxu0 0.0
    %2154 = vmatpush1.msra.mxu0 %v2133
    %2155 = vmatprep.subr.mxu0 0.0
    %2156 = vmatpush1.msra.mxu0 %v2134
    %2157 = vmatprep.subr.mxu0 0.0
    %2158 = vmatpush1.msra.mxu0 %v2135
    %2159 = vmatprep.subr.mxu0 0.0
    %2160 = vmatpush1.msra.mxu0 %v2136
    %2161 = vmatprep.subr.mxu0 0.0
    %2162 = vmatpush1.msra.mxu0 %v2137
    %2163 = vmatprep.subr.mxu0 0.0
    %2164 = vmatpush1.msra.mxu0 %v2138
    %2165 = vmatprep.subr.mxu0 0.0
    %2166 = vmatpush1.msra.mxu0 %v2139
    %2167 = vmatprep.subr.mxu0 0.0
    %2168 = vmatpush1.msra.mxu0 %v2140
    %2169 = vmatprep.subr.mxu0 0.0
    %2170 = vmatpush1.msra.mxu0 %v2141
    %2171 = vmatprep.subr.mxu0 0.0
    %2172 = vmatpush1.msra.mxu0 %v2142
    %2173 = vmatprep.subr.mxu0 0.0
    %2174 = vmatpush1.msra.mxu0 %v2143
    %2175 = vmatprep.subr.mxu0 0.0
    %2176 = vmatpush1.msra.mxu0 %v2144
    %2177 = vmatprep.subr.mxu0 0.0
    %2178 = vmatpush1.msra.mxu0 0.0
    %2179 = vmatprep.subr.mxu0 0.0
    %2180 = vmatpush1.msra.mxu0 0.0
    %2181 = vmatprep.subr.mxu0 0.0
    %2182 = vmatpush1.msra.mxu0 0.0
    %2183 = vmatprep.subr.mxu0 0.0
    %2184 = vmatpush1.msra.mxu0 0.0
    %2185 = vmatprep.subr.mxu0 0.0
    %2186 = vmatpush1.msra.mxu0 0.0
    %2187 = vmatprep.subr.mxu0 0.0
    %2188 = vmatpush1.msra.mxu0 0.0
    %2189 = vmatprep.subr.mxu0 0.0
    %2190 = vmatpush1.msra.mxu0 0.0
    %2191 = vmatprep.subr.mxu0 0.0
    %2192 = vmatpush1.msra.mxu0 0.0
    %2193 = vmatprep.subr.mxu0 0.0
    %2194 = vmatpush1.msra.mxu0 0.0
    %2195 = vmatprep.subr.mxu0 0.0
    %2196 = vmatpush1.msra.mxu0 0.0
    %2197 = vmatprep.subr.mxu0 0.0
    %2198 = vmatpush1.msra.mxu0 0.0
    %2199 = vmatprep.subr.mxu0 0.0
    %2200 = vmatpush1.msra.mxu0 0.0
    %2201 = vmatprep.subr.mxu0 0.0
    %2202 = vmatpush1.msra.mxu0 0.0
    %2203 = vmatprep.subr.mxu0 0.0
    %2204 = vmatpush1.msra.mxu0 0.0
    %2205 = vmatprep.subr.mxu0 0.0
    %2206 = vmatpush1.msra.mxu0 0.0
    %2207 = vmatprep.subr.mxu0 0.0
    %2208 = vmatpush1.msra.mxu0 0.0
    %2209 = vmatprep.mubr.f32.mxu0 0.0
    %2210 = vmatmul.mubr.f32.gmra.mrb[0].mxu0 %v2128
    %v2211 = vpop.f32.mrb[0].mxu0
    %v2212 = vadd.f32 %v1830, %v2211
    %v2213 = vpop.f32.mrb[0].mxu0
    %2214 = vdwg.mxu0
    %v2217 = vcombine.low %v1513, %v2212
    %v2219 = vunpack.c.l.s4 1983009808
    %v2220 = vunpack.c.0.s8 %v2219
    %v2221 = vlaneseq
    %v2222 = vshrl.u32 %v2221, 7
    %v2223 = vsub.s32 %v2220, %v2222
    %v2224 = vrot.slane %v2217, %v2223
    %2226 = vst [vmem:[#allocation13] sm:$0xf] %v2224
    // Predicated region
    $region50: #{tpu_custom_call.1} parent=1 // pred_check
      _
    $region51: #{tpu_custom_call.1} parent=1 // pred_check_branch
      %2228 = sbr.rel (0) target = $region53
    $region52: #{tpu_custom_call.1} parent=1 // pred_region
      %s2230 = ssub.s32 64, 64
      %2231 = vsyncadd [#allocation4], %s2230
      %s2233 = sshll.u32 [#allocation13], 4
      %s2234 = int_to_ptr.vmem [resolvable:$true] %s2233
      %2236 = dma.vmem_to_hbm [thread:$0]  %s2234, 64, %s6, [#allocation4]
    $region53: #{tpu_custom_call.1} parent=1 // pred_fallthru
      _
    // Predicated region
    $region54: #{tpu_custom_call.1} parent=1 // pred_check
      _
    $region55: #{tpu_custom_call.1} parent=1 // pred_check_branch
      %2238 = sbr.rel (0) target = $region57
    $region56: #{tpu_custom_call.1} parent=1 // pred_region
      %2239 = dma.done [#allocation4], 64
    $region57: #{tpu_custom_call.1} parent=1 // pred_fallthru
      _
    %2240 = vsyncpa [#allocation3], 1
    %2241 = vsyncpa [#allocation6], 1
    %2242 = vsyncpa [#allocation9], 1
    %2243 = vsyncpa [#allocation12], 1
    %2244 = vsyncpa [#allocation4], 1

</llo_original>
